<compile_context>
chip_gen: v7x
topology: tpu7x:2x2x1
jax: 0.10.0
libtpu: 0.0.40
codegen_flags: <defaults>
</compile_context>

<pallas_src>
import functools

import jax
import jax.numpy as jnp
from jax.experimental import pallas as pl
from jax.experimental.pallas import tpu as pltpu

SUBLANE = 8            # f32 sublane tile
LANE = 128             # lane tile
MXU_DTYPE = jnp.bfloat16   # matmul operand dtype (accumulation stays f32)


def _round_up(x, m):
    return ((x + m - 1) // m) * m


# ---------------------------------------------------------------------------
# Fused kernel: embedding gather + L GRU cells + fc_out, all in one pallas_call
# ---------------------------------------------------------------------------

def _make_fused_decoder_kernel(num_layers: int, hp: int):
    """hp = padded hidden size (multiple of 128) so gate slices are lane-aligned."""

    def kernel(*refs):
        # inputs: ids(SMEM), emb, hidden, [w_ih_t, w_hh_t, b_ih, b_hh] * L, w_out_t, b_out
        # outputs: pred, hidden_out ; scratch: x
        n_in = 3 + 4 * num_layers + 2
        ids_ref, emb_ref, h0_ref = refs[0], refs[1], refs[2]
        layer_refs = refs[3:3 + 4 * num_layers]
        w_out_ref = refs[3 + 4 * num_layers]
        b_out_ref = refs[4 + 4 * num_layers]
        pred_ref, hid_out_ref, x_ref = refs[n_in], refs[n_in + 1], refs[n_in + 2]

        bp = x_ref.shape[0]

        # ---- embedding gather: ids are scalars in SMEM, rows come from the
        # VMEM-resident (padded) table.  bp is small and static -> unrolled copies.
        for b in range(bp):
            x_ref[pl.ds(b, 1), :] = emb_ref[pl.ds(ids_ref[b], 1), :]

        x = x_ref[...]                                     # [BP, EP] f32

        # ---- GRU layers (one time step each); torch gate order (r, z, n).
        for l in range(num_layers):
            w_ih_t = layer_refs[4 * l][...]                # [IN_P, 3*HP] bf16
            w_hh_t = layer_refs[4 * l + 1][...]            # [HP,   3*HP] bf16
            b_ih = layer_refs[4 * l + 2][...]              # [1, 3*HP] f32
            b_hh = layer_refs[4 * l + 3][...]              # [1, 3*HP] f32
            h_prev = h0_ref[l]                             # [BP, HP] f32

            gx = jnp.dot(x.astype(w_ih_t.dtype), w_ih_t,
                         preferred_element_type=jnp.float32) + b_ih
            gh = jnp.dot(h_prev.astype(w_hh_t.dtype), w_hh_t,
                         preferred_element_type=jnp.float32) + b_hh

            # Lane-aligned slices (hp % 128 == 0); elementwise stays f32 (VPU/EUP).
            r = jax.nn.sigmoid(gx[:, :hp] + gh[:, :hp])
            z = jax.nn.sigmoid(gx[:, hp:2 * hp] + gh[:, hp:2 * hp])
            n = jnp.tanh(gx[:, 2 * hp:] + r * gh[:, 2 * hp:])
            h_new = (1.0 - z) * n + z * h_prev

            hid_out_ref[l] = h_new                         # write stacked hidden in-kernel
            x = h_new                                      # inter-layer dropout = identity

        # ---- fc_out (lane-dense padded output)
        pred_ref[...] = (
            jnp.dot(x.astype(w_out_ref.dtype), w_out_ref[...],
                    preferred_element_type=jnp.float32) + b_out_ref[...])

    return kernel


# ---------------------------------------------------------------------------
# Parameter init (torch-like layout) and one-time packing (pad + transpose + cast)
# ---------------------------------------------------------------------------

def init_params(key, output_dim, emb_dim, hidden_dim, num_layers):
    params = {}
    k = 1.0 / jnp.sqrt(hidden_dim)

    def uni(key, shape):
        return jax.random.uniform(key, shape, jnp.float32, minval=-k, maxval=k)

    keys = jax.random.split(key, 4 * num_layers + 6)
    it = iter(keys)

    # nn.Embedding(output_dim, emb_dim)
    params["embedding"] = jax.random.normal(next(it), (output_dim, emb_dim), jnp.float32)

    # nn.GRU(emb_dim, hidden_dim, num_layers, bidirectional=False)
    for l in range(num_layers):
        in_dim = emb_dim if l == 0 else hidden_dim
        params[f"w_ih_{l}"] = uni(next(it), (3 * hidden_dim, in_dim))
        params[f"w_hh_{l}"] = uni(next(it), (3 * hidden_dim, hidden_dim))
        params[f"b_ih_{l}"] = uni(next(it), (3 * hidden_dim,))
        params[f"b_hh_{l}"] = uni(next(it), (3 * hidden_dim,))

    # nn.Linear(hidden_dim * 2, hidden_dim) -- only used if bidirectional=True (skipped)
    params["w_fc_hidden"] = uni(next(it), (hidden_dim, 2 * hidden_dim))
    params["b_fc_hidden"] = uni(next(it), (hidden_dim,))

    # nn.Linear(hidden_dim, output_dim)
    params["w_out"] = uni(next(it), (output_dim, hidden_dim))
    params["b_out"] = uni(next(it), (output_dim,))
    return params


def _pack_gate_weight(w, hidden_dim, hp, in_dim, in_p):
    # w: [3H, IN] (torch layout, gates r,z,n stacked) -> [IN_P, 3*HP] with each gate
    # occupying a lane-aligned HP-wide block; padded entries are zero.
    w3 = w.reshape(3, hidden_dim, in_dim)
    w3 = jnp.pad(w3, ((0, 0), (0, hp - hidden_dim), (0, in_p - in_dim)))
    return jnp.transpose(w3, (2, 0, 1)).reshape(in_p, 3 * hp).astype(MXU_DTYPE)


def _pack_gate_bias(b, hidden_dim, hp):
    b3 = jnp.pad(b.reshape(3, hidden_dim), ((0, 0), (0, hp - hidden_dim)))
    return b3.reshape(1, 3 * hp).astype(jnp.float32)


def pack_params(params, *, output_dim, emb_dim, hidden_dim, num_layers):
    """One-time padding / transposing / casting; avoids per-call XLA transposes."""
    ep = _round_up(emb_dim, LANE)
    hp = _round_up(hidden_dim, LANE)
    op = _round_up(output_dim, LANE)
    vp = _round_up(output_dim, SUBLANE)       # embedding rows (vocab)

    packed = {}
    packed["embedding"] = jnp.pad(
        params["embedding"], ((0, vp - output_dim), (0, ep - emb_dim))
    ).astype(jnp.float32)

    for l in range(num_layers):
        in_dim = emb_dim if l == 0 else hidden_dim
        in_p = ep if l == 0 else hp
        packed[f"w_ih_t_{l}"] = _pack_gate_weight(params[f"w_ih_{l}"], hidden_dim, hp, in_dim, in_p)
        packed[f"w_hh_t_{l}"] = _pack_gate_weight(params[f"w_hh_{l}"], hidden_dim, hp, hidden_dim, hp)
        packed[f"b_ih_{l}"] = _pack_gate_bias(params[f"b_ih_{l}"], hidden_dim, hp)
        packed[f"b_hh_{l}"] = _pack_gate_bias(params[f"b_hh_{l}"], hidden_dim, hp)

    packed["w_out_t"] = jnp.pad(
        params["w_out"].T, ((0, hp - hidden_dim), (0, op - output_dim))
    ).astype(MXU_DTYPE)
    packed["b_out"] = jnp.pad(params["b_out"], (0, op - output_dim)).reshape(1, op).astype(jnp.float32)
    # fc_hidden is only used when bidirectional=True; not packed (branch statically skipped).
    return packed


# ---------------------------------------------------------------------------
# Decoder_GRU.forward
# ---------------------------------------------------------------------------

@functools.partial(jax.jit, static_argnames=("num_layers", "output_dim"))
def decoder_gru_forward(packed, input_ids, hidden, cell, *, num_layers, output_dim):
    """
    input_ids: [B] int32 token ids (PyTorch: input.unsqueeze(0) -> seq_len 1)
    hidden:    [num_layers, B, H]
    cell:      ignored (nn.GRU has no cell state)
    returns (prediction [B, output_dim], hidden [num_layers, B, H])
    """
    del cell

    B = input_ids.shape[0]
    H = hidden.shape[-1]
    ep = packed["w_ih_t_0"].shape[0]
    hp = packed["w_hh_t_0"].shape[0]
    op = packed["w_out_t"].shape[1]
    bp = _round_up(max(B, SUBLANE), SUBLANE)

    # Pad runtime inputs (zero-padded hidden keeps padded lanes/rows inert).
    ids_p = jnp.zeros((bp,), jnp.int32).at[:B].set(input_ids.astype(jnp.int32))
    hidden_p = jnp.zeros((num_layers, bp, hp), jnp.float32).at[:, :B, :H].set(
        hidden.astype(jnp.float32))

    args = [ids_p, packed["embedding"], hidden_p]
    for l in range(num_layers):
        args += [packed[f"w_ih_t_{l}"], packed[f"w_hh_t_{l}"],
                 packed[f"b_ih_{l}"], packed[f"b_hh_{l}"]]
    args += [packed["w_out_t"], packed["b_out"]]

    in_specs = ([pl.BlockSpec(memory_space=pltpu.MemorySpace.SMEM)] +
                [pl.BlockSpec(memory_space=pltpu.MemorySpace.VMEM)] * (len(args) - 1))

    pred_p, hid_p = pl.pallas_call(
        _make_fused_decoder_kernel(num_layers, hp),
        out_shape=(jax.ShapeDtypeStruct((bp, op), jnp.float32),
                   jax.ShapeDtypeStruct((num_layers, bp, hp), jnp.float32)),
        in_specs=in_specs,
        out_specs=(pl.BlockSpec(memory_space=pltpu.MemorySpace.VMEM),
                   pl.BlockSpec(memory_space=pltpu.MemorySpace.VMEM)),
        scratch_shapes=[pltpu.VMEM((bp, ep), jnp.float32)],
    )(*args)

    # TODO(synk): at serving scale (large batch / vocab / hidden) add a 'parallel'
    # batch or output-dim grid axis (v7x has 2 TensorCores) and tile fc_out over
    # output_dim with a BlockSpec so the weight need not be fully VMEM-resident
    # (v7x: 64 MiB VMEM/TC); at these toy sizes everything fits comfortably.

    prediction = pred_p[:B, :output_dim]
    hidden_out = hid_p[:, :B, :H]
    return prediction, hidden_out


# ---------------------------------------------------------------------------
# Pure-JAX reference (torch-layout f32 math) for a numerics check
# ---------------------------------------------------------------------------

def _reference_forward(params, input_ids, hidden, num_layers):
    x = params["embedding"][input_ids]
    H = hidden.shape[-1]
    new_h = []
    for l in range(num_layers):
        gx = x @ params[f"w_ih_{l}"].T + params[f"b_ih_{l}"]
        gh = hidden[l] @ params[f"w_hh_{l}"].T + params[f"b_hh_{l}"]
        r = jax.nn.sigmoid(gx[:, :H] + gh[:, :H])
        z = jax.nn.sigmoid(gx[:, H:2 * H] + gh[:, H:2 * H])
        n = jnp.tanh(gx[:, 2 * H:] + r * gh[:, 2 * H:])
        h_new = (1.0 - z) * n + z * hidden[l]
        new_h.append(h_new)
        x = h_new
    pred = x @ params["w_out"].T + params["b_out"]
    return pred, jnp.stack(new_h, axis=0)


# ---------------------------------------------------------------------------
# Driver
# ---------------------------------------------------------------------------

if __name__ == "__main__":
    OUTPUT_DIM = 16   # vocab size
    EMB_DIM = 32
    HIDDEN_DIM = 32
    NUM_LAYERS = 2
    BATCH = 4

    root = jax.random.PRNGKey(0)
    k_params, k_ids, k_hidden, k_cell = jax.random.split(root, 4)

    params = init_params(k_params, OUTPUT_DIM, EMB_DIM, HIDDEN_DIM, NUM_LAYERS)
    packed = pack_params(params, output_dim=OUTPUT_DIM, emb_dim=EMB_DIM,
                         hidden_dim=HIDDEN_DIM, num_layers=NUM_LAYERS)

    input_ids = jax.random.randint(k_ids, (BATCH,), 0, OUTPUT_DIM, dtype=jnp.int32)
    hidden = jax.random.normal(k_hidden, (NUM_LAYERS, BATCH, HIDDEN_DIM), jnp.float32)
    cell = jax.random.normal(k_cell, (NUM_LAYERS, BATCH, HIDDEN_DIM), jnp.float32)

    prediction, hidden_out = decoder_gru_forward(
        packed, input_ids, hidden, cell, num_layers=NUM_LAYERS, output_dim=OUTPUT_DIM)
    jax.block_until_ready((prediction, hidden_out))

    assert prediction.shape == (BATCH, OUTPUT_DIM), prediction.shape
    assert hidden_out.shape == (NUM_LAYERS, BATCH, HIDDEN_DIM), hidden_out.shape
    assert jnp.all(jnp.isfinite(prediction)) and jnp.all(jnp.isfinite(hidden_out))

    # Numerics check vs f32 reference (kernel uses bf16 MXU operands -> loose tol).
    pred_ref, hid_ref = _reference_forward(params, input_ids, hidden, NUM_LAYERS)
    assert jnp.allclose(prediction, pred_ref, atol=5e-2, rtol=5e-2)
    assert jnp.allclose(hidden_out, hid_ref, atol=5e-2, rtol=5e-2)

    print("KERNEL_OK")
</pallas_src>

<mosaic_0001>
module attributes {stable_mosaic.version = 11 : i64} {
  func.func @kernel(%arg0: memref<8xi32, #tpu.memory_space<smem>>, %arg1: memref<16x128xf32, #tpu.memory_space<vmem>>, %arg2: memref<2x8x128xf32, #tpu.memory_space<vmem>>, %arg3: memref<128x384xbf16, #tpu.memory_space<vmem>>, %arg4: memref<128x384xbf16, #tpu.memory_space<vmem>>, %arg5: memref<1x384xf32, #tpu.memory_space<vmem>>, %arg6: memref<1x384xf32, #tpu.memory_space<vmem>>, %arg7: memref<128x384xbf16, #tpu.memory_space<vmem>>, %arg8: memref<128x384xbf16, #tpu.memory_space<vmem>>, %arg9: memref<1x384xf32, #tpu.memory_space<vmem>>, %arg10: memref<1x384xf32, #tpu.memory_space<vmem>>, %arg11: memref<128x128xbf16, #tpu.memory_space<vmem>>, %arg12: memref<1x128xf32, #tpu.memory_space<vmem>>, %arg13: memref<8x128xf32, #tpu.memory_space<vmem>>, %arg14: memref<2x8x128xf32, #tpu.memory_space<vmem>>, %arg15: memref<8x128xf32, #tpu.memory_space<vmem>>) attributes {dimension_semantics = [], scalar_prefetch = 0 : i64, scratch_operands = 1 : i64, tpu.core_type = #tpu.core_type<tc>} {
    %c0 = arith.constant 0 : index
    %0 = memref.load %arg0[%c0] : memref<8xi32, #tpu.memory_space<smem>>
    %1 = arith.index_cast %0 : i32 to index
    %c0_0 = arith.constant 0 : index
    %2 = vector.load %arg1[%1, %c0_0] : memref<16x128xf32, #tpu.memory_space<vmem>>, vector<1x128xf32>
    %c0_1 = arith.constant 0 : index
    %c0_2 = arith.constant 0 : index
    %3 = vector.load %arg15[%c0_1, %c0_2] : memref<8x128xf32, #tpu.memory_space<vmem>>, vector<1x128xf32>
    tpu.vector_store %arg15[%c0_1, %c0_2], %2 {strides = array<i32>} : memref<8x128xf32, #tpu.memory_space<vmem>>, vector<1x128xf32>,
    %c1 = arith.constant 1 : index
    %4 = memref.load %arg0[%c1] : memref<8xi32, #tpu.memory_space<smem>>
    %5 = arith.index_cast %4 : i32 to index
    %c0_3 = arith.constant 0 : index
    %6 = vector.load %arg1[%5, %c0_3] : memref<16x128xf32, #tpu.memory_space<vmem>>, vector<1x128xf32>
    %c1_4 = arith.constant 1 : index
    %c0_5 = arith.constant 0 : index
    %7 = vector.load %arg15[%c1_4, %c0_5] : memref<8x128xf32, #tpu.memory_space<vmem>>, vector<1x128xf32>
    tpu.vector_store %arg15[%c1_4, %c0_5], %6 {strides = array<i32>} : memref<8x128xf32, #tpu.memory_space<vmem>>, vector<1x128xf32>,
    %c2 = arith.constant 2 : index
    %8 = memref.load %arg0[%c2] : memref<8xi32, #tpu.memory_space<smem>>
    %9 = arith.index_cast %8 : i32 to index
    %c0_6 = arith.constant 0 : index
    %10 = vector.load %arg1[%9, %c0_6] : memref<16x128xf32, #tpu.memory_space<vmem>>, vector<1x128xf32>
    %c2_7 = arith.constant 2 : index
    %c0_8 = arith.constant 0 : index
    %11 = vector.load %arg15[%c2_7, %c0_8] : memref<8x128xf32, #tpu.memory_space<vmem>>, vector<1x128xf32>
    tpu.vector_store %arg15[%c2_7, %c0_8], %10 {strides = array<i32>} : memref<8x128xf32, #tpu.memory_space<vmem>>, vector<1x128xf32>,
    %c3 = arith.constant 3 : index
    %12 = memref.load %arg0[%c3] : memref<8xi32, #tpu.memory_space<smem>>
    %13 = arith.index_cast %12 : i32 to index
    %c0_9 = arith.constant 0 : index
    %14 = vector.load %arg1[%13, %c0_9] : memref<16x128xf32, #tpu.memory_space<vmem>>, vector<1x128xf32>
    %c3_10 = arith.constant 3 : index
    %c0_11 = arith.constant 0 : index
    %15 = vector.load %arg15[%c3_10, %c0_11] : memref<8x128xf32, #tpu.memory_space<vmem>>, vector<1x128xf32>
    tpu.vector_store %arg15[%c3_10, %c0_11], %14 {strides = array<i32>} : memref<8x128xf32, #tpu.memory_space<vmem>>, vector<1x128xf32>,
    %c4 = arith.constant 4 : index
    %16 = memref.load %arg0[%c4] : memref<8xi32, #tpu.memory_space<smem>>
    %17 = arith.index_cast %16 : i32 to index
    %c0_12 = arith.constant 0 : index
    %18 = vector.load %arg1[%17, %c0_12] : memref<16x128xf32, #tpu.memory_space<vmem>>, vector<1x128xf32>
    %c4_13 = arith.constant 4 : index
    %c0_14 = arith.constant 0 : index
    %19 = vector.load %arg15[%c4_13, %c0_14] : memref<8x128xf32, #tpu.memory_space<vmem>>, vector<1x128xf32>
    tpu.vector_store %arg15[%c4_13, %c0_14], %18 {strides = array<i32>} : memref<8x128xf32, #tpu.memory_space<vmem>>, vector<1x128xf32>,
    %c5 = arith.constant 5 : index
    %20 = memref.load %arg0[%c5] : memref<8xi32, #tpu.memory_space<smem>>
    %21 = arith.index_cast %20 : i32 to index
    %c0_15 = arith.constant 0 : index
    %22 = vector.load %arg1[%21, %c0_15] : memref<16x128xf32, #tpu.memory_space<vmem>>, vector<1x128xf32>
    %c5_16 = arith.constant 5 : index
    %c0_17 = arith.constant 0 : index
    %23 = vector.load %arg15[%c5_16, %c0_17] : memref<8x128xf32, #tpu.memory_space<vmem>>, vector<1x128xf32>
    tpu.vector_store %arg15[%c5_16, %c0_17], %22 {strides = array<i32>} : memref<8x128xf32, #tpu.memory_space<vmem>>, vector<1x128xf32>,
    %c6 = arith.constant 6 : index
    %24 = memref.load %arg0[%c6] : memref<8xi32, #tpu.memory_space<smem>>
    %25 = arith.index_cast %24 : i32 to index
    %c0_18 = arith.constant 0 : index
    %26 = vector.load %arg1[%25, %c0_18] : memref<16x128xf32, #tpu.memory_space<vmem>>, vector<1x128xf32>
    %c6_19 = arith.constant 6 : index
    %c0_20 = arith.constant 0 : index
    %27 = vector.load %arg15[%c6_19, %c0_20] : memref<8x128xf32, #tpu.memory_space<vmem>>, vector<1x128xf32>
    tpu.vector_store %arg15[%c6_19, %c0_20], %26 {strides = array<i32>} : memref<8x128xf32, #tpu.memory_space<vmem>>, vector<1x128xf32>,
    %c7 = arith.constant 7 : index
    %28 = memref.load %arg0[%c7] : memref<8xi32, #tpu.memory_space<smem>>
    %29 = arith.index_cast %28 : i32 to index
    %c0_21 = arith.constant 0 : index
    %30 = vector.load %arg1[%29, %c0_21] : memref<16x128xf32, #tpu.memory_space<vmem>>, vector<1x128xf32>
    %c7_22 = arith.constant 7 : index
    %c0_23 = arith.constant 0 : index
    %31 = vector.load %arg15[%c7_22, %c0_23] : memref<8x128xf32, #tpu.memory_space<vmem>>, vector<1x128xf32>
    tpu.vector_store %arg15[%c7_22, %c0_23], %30 {strides = array<i32>} : memref<8x128xf32, #tpu.memory_space<vmem>>, vector<1x128xf32>,
    %c0_24 = arith.constant 0 : index
    %c0_25 = arith.constant 0 : index
    %32 = vector.load %arg15[%c0_24, %c0_25] : memref<8x128xf32, #tpu.memory_space<vmem>>, vector<8x128xf32>
    %c0_26 = arith.constant 0 : index
    %c0_27 = arith.constant 0 : index
    %33 = vector.load %arg3[%c0_26, %c0_27] : memref<128x384xbf16, #tpu.memory_space<vmem>>, vector<128x384xbf16>
    %c0_28 = arith.constant 0 : index
    %c0_29 = arith.constant 0 : index
    %34 = vector.load %arg4[%c0_28, %c0_29] : memref<128x384xbf16, #tpu.memory_space<vmem>>, vector<128x384xbf16>
    %c0_30 = arith.constant 0 : index
    %c0_31 = arith.constant 0 : index
    %35 = vector.load %arg5[%c0_30, %c0_31] : memref<1x384xf32, #tpu.memory_space<vmem>>, vector<1x384xf32>
    %c0_32 = arith.constant 0 : index
    %c0_33 = arith.constant 0 : index
    %36 = vector.load %arg6[%c0_32, %c0_33] : memref<1x384xf32, #tpu.memory_space<vmem>>, vector<1x384xf32>
    %c0_34 = arith.constant 0 : index
    %c0_35 = arith.constant 0 : index
    %c0_36 = arith.constant 0 : index
    %37 = vector.load %arg2[%c0_34, %c0_35, %c0_36] : memref<2x8x128xf32, #tpu.memory_space<vmem>>, vector<1x8x128xf32>
    %38 = vector.shape_cast %37 : vector<1x8x128xf32> to vector<8x128xf32>
    %39 = arith.truncf %32 : vector<8x128xf32> to vector<8x128xbf16>
    %cst = arith.constant dense<0.000000e+00> : vector<8x384xf32>
    %40 = tpu.matmul %39, %33, %cst {dimension_numbers = #tpu.dot_dimension_numbers<[1], [0], [0], [1], [0, 0, 1, 1], [], []>} : vector<8x128xbf16>, vector<128x384xbf16>, vector<8x384xf32> -> vector<8x384xf32>
    %41 = vector.broadcast %35 : vector<1x384xf32> to vector<8x384xf32>
    %42 = arith.addf %40, %41 : vector<8x384xf32>
    %43 = arith.truncf %38 : vector<8x128xf32> to vector<8x128xbf16>
    %cst_37 = arith.constant dense<0.000000e+00> : vector<8x384xf32>
    %44 = tpu.matmul %43, %34, %cst_37 {dimension_numbers = #tpu.dot_dimension_numbers<[1], [0], [0], [1], [0, 0, 1, 1], [], []>} : vector<8x128xbf16>, vector<128x384xbf16>, vector<8x384xf32> -> vector<8x384xf32>
    %45 = vector.broadcast %36 : vector<1x384xf32> to vector<8x384xf32>
    %46 = arith.addf %44, %45 : vector<8x384xf32>
    %47 = vector.extract_strided_slice %42 {offsets = [0, 0], sizes = [8, 128], strides = [1, 1]} : vector<8x384xf32> to vector<8x128xf32>
    %48 = vector.extract_strided_slice %46 {offsets = [0, 0], sizes = [8, 128], strides = [1, 1]} : vector<8x384xf32> to vector<8x128xf32>
    %49 = arith.addf %47, %48 : vector<8x128xf32>
    %50 = arith.negf %49 : vector<8x128xf32>
    %51 = math.exp %50 : vector<8x128xf32>
    %cst_38 = arith.constant 1.000000e+00 : f32
    %52 = vector.broadcast %cst_38 : f32 to vector<8x128xf32>
    %53 = arith.addf %52, %51 : vector<8x128xf32>
    %54 = arith.divf %52, %53 : vector<8x128xf32>
    %55 = vector.extract_strided_slice %42 {offsets = [0, 128], sizes = [8, 128], strides = [1, 1]} : vector<8x384xf32> to vector<8x128xf32>
    %56 = vector.extract_strided_slice %46 {offsets = [0, 128], sizes = [8, 128], strides = [1, 1]} : vector<8x384xf32> to vector<8x128xf32>
    %57 = arith.addf %55, %56 : vector<8x128xf32>
    %58 = arith.negf %57 : vector<8x128xf32>
    %59 = math.exp %58 : vector<8x128xf32>
    %cst_39 = arith.constant 1.000000e+00 : f32
    %60 = vector.broadcast %cst_39 : f32 to vector<8x128xf32>
    %61 = arith.addf %60, %59 : vector<8x128xf32>
    %62 = arith.divf %60, %61 : vector<8x128xf32>
    %63 = vector.extract_strided_slice %42 {offsets = [0, 256], sizes = [8, 128], strides = [1, 1]} : vector<8x384xf32> to vector<8x128xf32>
    %64 = vector.extract_strided_slice %46 {offsets = [0, 256], sizes = [8, 128], strides = [1, 1]} : vector<8x384xf32> to vector<8x128xf32>
    %65 = arith.mulf %54, %64 : vector<8x128xf32>
    %66 = arith.addf %63, %65 : vector<8x128xf32>
    %67 = math.tanh %66 : vector<8x128xf32>
    %cst_40 = arith.constant 1.000000e+00 : f32
    %68 = vector.broadcast %cst_40 : f32 to vector<8x128xf32>
    %69 = arith.subf %68, %62 : vector<8x128xf32>
    %70 = arith.mulf %69, %67 : vector<8x128xf32>
    %71 = arith.mulf %62, %38 : vector<8x128xf32>
    %72 = arith.addf %70, %71 : vector<8x128xf32>
    %c0_41 = arith.constant 0 : index
    %c0_42 = arith.constant 0 : index
    %c0_43 = arith.constant 0 : index
    %73 = vector.load %arg14[%c0_41, %c0_42, %c0_43] : memref<2x8x128xf32, #tpu.memory_space<vmem>>, vector<1x8x128xf32>
    %74 = vector.shape_cast %73 : vector<1x8x128xf32> to vector<8x128xf32>
    %75 = vector.shape_cast %72 : vector<8x128xf32> to vector<1x8x128xf32>
    tpu.vector_store %arg14[%c0_41, %c0_42, %c0_43], %75 {strides = array<i32>} : memref<2x8x128xf32, #tpu.memory_space<vmem>>, vector<1x8x128xf32>,
    %c0_44 = arith.constant 0 : index
    %c0_45 = arith.constant 0 : index
    %76 = vector.load %arg7[%c0_44, %c0_45] : memref<128x384xbf16, #tpu.memory_space<vmem>>, vector<128x384xbf16>
    %c0_46 = arith.constant 0 : index
    %c0_47 = arith.constant 0 : index
    %77 = vector.load %arg8[%c0_46, %c0_47] : memref<128x384xbf16, #tpu.memory_space<vmem>>, vector<128x384xbf16>
    %c0_48 = arith.constant 0 : index
    %c0_49 = arith.constant 0 : index
    %78 = vector.load %arg9[%c0_48, %c0_49] : memref<1x384xf32, #tpu.memory_space<vmem>>, vector<1x384xf32>
    %c0_50 = arith.constant 0 : index
    %c0_51 = arith.constant 0 : index
    %79 = vector.load %arg10[%c0_50, %c0_51] : memref<1x384xf32, #tpu.memory_space<vmem>>, vector<1x384xf32>
    %c1_52 = arith.constant 1 : index
    %c0_53 = arith.constant 0 : index
    %c0_54 = arith.constant 0 : index
    %80 = vector.load %arg2[%c1_52, %c0_53, %c0_54] : memref<2x8x128xf32, #tpu.memory_space<vmem>>, vector<1x8x128xf32>
    %81 = vector.shape_cast %80 : vector<1x8x128xf32> to vector<8x128xf32>
    %82 = arith.truncf %72 : vector<8x128xf32> to vector<8x128xbf16>
    %cst_55 = arith.constant dense<0.000000e+00> : vector<8x384xf32>
    %83 = tpu.matmul %82, %76, %cst_55 {dimension_numbers = #tpu.dot_dimension_numbers<[1], [0], [0], [1], [0, 0, 1, 1], [], []>} : vector<8x128xbf16>, vector<128x384xbf16>, vector<8x384xf32> -> vector<8x384xf32>
    %84 = vector.broadcast %78 : vector<1x384xf32> to vector<8x384xf32>
    %85 = arith.addf %83, %84 : vector<8x384xf32>
    %86 = arith.truncf %81 : vector<8x128xf32> to vector<8x128xbf16>
    %cst_56 = arith.constant dense<0.000000e+00> : vector<8x384xf32>
    %87 = tpu.matmul %86, %77, %cst_56 {dimension_numbers = #tpu.dot_dimension_numbers<[1], [0], [0], [1], [0, 0, 1, 1], [], []>} : vector<8x128xbf16>, vector<128x384xbf16>, vector<8x384xf32> -> vector<8x384xf32>
    %88 = vector.broadcast %79 : vector<1x384xf32> to vector<8x384xf32>
    %89 = arith.addf %87, %88 : vector<8x384xf32>
    %90 = vector.extract_strided_slice %85 {offsets = [0, 0], sizes = [8, 128], strides = [1, 1]} : vector<8x384xf32> to vector<8x128xf32>
    %91 = vector.extract_strided_slice %89 {offsets = [0, 0], sizes = [8, 128], strides = [1, 1]} : vector<8x384xf32> to vector<8x128xf32>
    %92 = arith.addf %90, %91 : vector<8x128xf32>
    %93 = arith.negf %92 : vector<8x128xf32>
    %94 = math.exp %93 : vector<8x128xf32>
    %cst_57 = arith.constant 1.000000e+00 : f32
    %95 = vector.broadcast %cst_57 : f32 to vector<8x128xf32>
    %96 = arith.addf %95, %94 : vector<8x128xf32>
    %97 = arith.divf %95, %96 : vector<8x128xf32>
    %98 = vector.extract_strided_slice %85 {offsets = [0, 128], sizes = [8, 128], strides = [1, 1]} : vector<8x384xf32> to vector<8x128xf32>
    %99 = vector.extract_strided_slice %89 {offsets = [0, 128], sizes = [8, 128], strides = [1, 1]} : vector<8x384xf32> to vector<8x128xf32>
    %100 = arith.addf %98, %99 : vector<8x128xf32>
    %101 = arith.negf %100 : vector<8x128xf32>
    %102 = math.exp %101 : vector<8x128xf32>
    %cst_58 = arith.constant 1.000000e+00 : f32
    %103 = vector.broadcast %cst_58 : f32 to vector<8x128xf32>
    %104 = arith.addf %103, %102 : vector<8x128xf32>
    %105 = arith.divf %103, %104 : vector<8x128xf32>
    %106 = vector.extract_strided_slice %85 {offsets = [0, 256], sizes = [8, 128], strides = [1, 1]} : vector<8x384xf32> to vector<8x128xf32>
    %107 = vector.extract_strided_slice %89 {offsets = [0, 256], sizes = [8, 128], strides = [1, 1]} : vector<8x384xf32> to vector<8x128xf32>
    %108 = arith.mulf %97, %107 : vector<8x128xf32>
    %109 = arith.addf %106, %108 : vector<8x128xf32>
    %110 = math.tanh %109 : vector<8x128xf32>
    %cst_59 = arith.constant 1.000000e+00 : f32
    %111 = vector.broadcast %cst_59 : f32 to vector<8x128xf32>
    %112 = arith.subf %111, %105 : vector<8x128xf32>
    %113 = arith.mulf %112, %110 : vector<8x128xf32>
    %114 = arith.mulf %105, %81 : vector<8x128xf32>
    %115 = arith.addf %113, %114 : vector<8x128xf32>
    %c1_60 = arith.constant 1 : index
    %c0_61 = arith.constant 0 : index
    %c0_62 = arith.constant 0 : index
    %116 = vector.load %arg14[%c1_60, %c0_61, %c0_62] : memref<2x8x128xf32, #tpu.memory_space<vmem>>, vector<1x8x128xf32>
    %117 = vector.shape_cast %116 : vector<1x8x128xf32> to vector<8x128xf32>
    %118 = vector.shape_cast %115 : vector<8x128xf32> to vector<1x8x128xf32>
    tpu.vector_store %arg14[%c1_60, %c0_61, %c0_62], %118 {strides = array<i32>} : memref<2x8x128xf32, #tpu.memory_space<vmem>>, vector<1x8x128xf32>,
    %119 = arith.truncf %115 : vector<8x128xf32> to vector<8x128xbf16>
    %c0_63 = arith.constant 0 : index
    %c0_64 = arith.constant 0 : index
    %120 = vector.load %arg11[%c0_63, %c0_64] : memref<128x128xbf16, #tpu.memory_space<vmem>>, vector<128x128xbf16>
    %cst_65 = arith.constant dense<0.000000e+00> : vector<8x128xf32>
    %121 = tpu.matmul %119, %120, %cst_65 {dimension_numbers = #tpu.dot_dimension_numbers<[1], [0], [0], [1], [0, 0, 1, 1], [], []>} : vector<8x128xbf16>, vector<128x128xbf16>, vector<8x128xf32> -> vector<8x128xf32>
    %c0_66 = arith.constant 0 : index
    %c0_67 = arith.constant 0 : index
    %122 = vector.load %arg12[%c0_66, %c0_67] : memref<1x128xf32, #tpu.memory_space<vmem>>, vector<1x128xf32>
    %123 = vector.broadcast %122 : vector<1x128xf32> to vector<8x128xf32>
    %124 = arith.addf %121, %123 : vector<8x128xf32>
    %c0_68 = arith.constant 0 : index
    %c0_69 = arith.constant 0 : index
    %125 = vector.load %arg13[%c0_68, %c0_69] : memref<8x128xf32, #tpu.memory_space<vmem>>, vector<8x128xf32>
    tpu.vector_store %arg13[%c0_68, %c0_69], %124 {strides = array<i32>} : memref<8x128xf32, #tpu.memory_space<vmem>>, vector<8x128xf32>,
    return
  }
}

</mosaic_0001>

<llo_original>
// kernel: decoder_gru_forward.1
$region0: #{decoder_gru_forward.1}
  #allocation0 [shape = 'u32[]', space=smem, size = 0x4, offset = 0x4, fixed_abs, tag = 'smem constant byte address 0x4 - core index']
  #allocation1 [shape = 'u32[144,128]{1,0:T(1,128)}', space=vmem, size = 0x12000, scoped, tag = 'internal scratch']
  #allocation2 [shape = 'f32[8,128]{1,0:T(8,128)}', space=vmem, size = 0x1000, scoped, tag = 'scratch operand']
  %s0 = inlined_call_operand.vmem [shape: s32[8], index: 0, kind: input, shape index: {}]
  %s1 = inlined_call_operand.hbm [shape: f32[16,128], index: 1, kind: input, shape index: {}]
  %s2 = inlined_call_operand.vmem [shape: f32[2,8,128], index: 2, kind: input, shape index: {}]
  %s3 = inlined_call_operand.hbm [shape: bf16[128,384], index: 3, kind: input, shape index: {}]
  %s4 = inlined_call_operand.hbm [shape: bf16[128,384], index: 4, kind: input, shape index: {}]
  %s5 = inlined_call_operand.hbm [shape: f32[1,384], index: 5, kind: input, shape index: {}]
  %s6 = inlined_call_operand.hbm [shape: f32[1,384], index: 6, kind: input, shape index: {}]
  %s7 = inlined_call_operand.hbm [shape: bf16[128,384], index: 7, kind: input, shape index: {}]
  %s8 = inlined_call_operand.hbm [shape: bf16[128,384], index: 8, kind: input, shape index: {}]
  %s9 = inlined_call_operand.hbm [shape: f32[1,384], index: 9, kind: input, shape index: {}]
  %s10 = inlined_call_operand.hbm [shape: f32[1,384], index: 10, kind: input, shape index: {}]
  %s11 = inlined_call_operand.vmem [shape: bf16[128,128], index: 11, kind: input, shape index: {}]
  %s12 = inlined_call_operand.vmem [shape: f32[1,128], index: 12, kind: input, shape index: {}]
  %s13 = inlined_call_operand.vmem [shape: f32[8,128], index: 13, kind: output, shape index: {0}]
  %s14 = inlined_call_operand.vmem [shape: f32[2,8,128], index: 14, kind: output, shape index: {1}]
  %15 = xla_tuple %s13, %s14
  %s16 = sld [smem:[#allocation0]]
  $region110: #{decoder_gru_forward.1} parent=0
    _
  %s18 = ssub.s32 1, %s16
  %s19 = scalar_select 0, %s18, %s16
  $region1: #{decoder_gru_forward.1} parent=0
    #allocation3 [shape = 'u8[512]{0}', space=smem, size = 0x200, scoped, tag = 'input window, operand 0, single buffered']
    #allocation4 [shape = 's32[1]{0}', space=sflag, size = 0x4, scoped, tag = 'scoped memory for decoder_gru_forward.1']
    #allocation5 [shape = 's32[1]{0}', space=sflag, size = 0x4, scoped, tag = 'scoped memory for decoder_gru_forward.1']
    #allocation6 [shape = 'u8[8192]{0}', space=vmem, size = 0x2000, scoped, tag = 'input window, operand 1, single buffered']
    #allocation7 [shape = 'u8[98304]{0}', space=vmem, size = 0x18000, scoped, tag = 'input window, operand 3, single buffered']
    #allocation8 [shape = 's32[1]{0}', space=sflag, size = 0x4, scoped, tag = 'scoped memory for decoder_gru_forward.1']
    #allocation9 [shape = 'u8[98304]{0}', space=vmem, size = 0x18000, scoped, tag = 'input window, operand 4, single buffered']
    #allocation10 [shape = 'u8[1536]{0}', space=vmem, size = 0x800, scoped, tag = 'input window, operand 5, single buffered']
    #allocation11 [shape = 's32[1]{0}', space=sflag, size = 0x4, scoped, tag = 'scoped memory for decoder_gru_forward.1']
    #allocation12 [shape = 'u8[1536]{0}', space=vmem, size = 0x800, scoped, tag = 'input window, operand 6, single buffered']
    #allocation13 [shape = 'u8[98304]{0}', space=vmem, size = 0x18000, scoped, tag = 'input window, operand 7, single buffered']
    #allocation14 [shape = 's32[1]{0}', space=sflag, size = 0x4, scoped, tag = 'scoped memory for decoder_gru_forward.1']
    #allocation15 [shape = 'u8[98304]{0}', space=vmem, size = 0x18000, scoped, tag = 'input window, operand 8, single buffered']
    #allocation16 [shape = 'u8[1536]{0}', space=vmem, size = 0x800, scoped, tag = 'input window, operand 9, single buffered']
    #allocation17 [shape = 's32[1]{0}', space=sflag, size = 0x4, scoped, tag = 'scoped memory for decoder_gru_forward.1']
    #allocation18 [shape = 'u8[1536]{0}', space=vmem, size = 0x800, scoped, tag = 'input window, operand 10, single buffered']
    %20 = vsyncpa [#allocation5], 0
    %21 = vsyncpa [#allocation4], 0
    %22 = vsyncpa [#allocation8], 0
    %23 = vsyncpa [#allocation11], 0
    %24 = vsyncpa [#allocation14], 0
    %25 = vsyncpa [#allocation17], 0
    // Predicated region
    $region2: #{decoder_gru_forward.1} parent=1 // pred_check
      _
    $region3: #{decoder_gru_forward.1} parent=1 // pred_check_branch
      %27 = sbr.rel (0) target = $region5
    $region4: #{decoder_gru_forward.1} parent=1 // pred_region
      %s29 = ssub.s32 16, 16
      %30 = vsyncadd [#allocation5], %s29
      %s32 = sshll.u32 %s0, 4
      %s33 = int_to_ptr.vmem [resolvable:$true] %s32
      %35 = dma.vmem_to_smem %s33, 16, [#allocation3], [#allocation5]
    $region5: #{decoder_gru_forward.1} parent=1 // pred_fallthru
      _
    // Predicated region
    $region6: #{decoder_gru_forward.1} parent=1 // pred_check
      _
    $region7: #{decoder_gru_forward.1} parent=1 // pred_check_branch
      %37 = sbr.rel (0) target = $region9
    $region8: #{decoder_gru_forward.1} parent=1 // pred_region
      %s39 = ssub.s32 256, 256
      %40 = vsyncadd [#allocation4], %s39
      %s41 = sshll.u32 [#allocation6], 4
      %s42 = int_to_ptr.vmem [resolvable:$true] %s41
      %47 = dma.hbm_to_vmem [thread:$0]  %s1, 256, %s42, [#allocation4], 128, 128, 8
    $region9: #{decoder_gru_forward.1} parent=1 // pred_fallthru
      _
    // Predicated region
    $region10: #{decoder_gru_forward.1} parent=1 // pred_check
      _
    $region11: #{decoder_gru_forward.1} parent=1 // pred_check_branch
      %49 = sbr.rel (0) target = $region13
    $region12: #{decoder_gru_forward.1} parent=1 // pred_region
      _
    $region13: #{decoder_gru_forward.1} parent=1 // pred_fallthru
      _
    // Predicated region
    $region14: #{decoder_gru_forward.1} parent=1 // pred_check
      _
    $region15: #{decoder_gru_forward.1} parent=1 // pred_check_branch
      %51 = sbr.rel (0) target = $region17
    $region16: #{decoder_gru_forward.1} parent=1 // pred_region
      %s53 = ssub.s32 3072, 3072
      %54 = vsyncadd [#allocation8], %s53
      %s55 = sshll.u32 [#allocation7], 4
      %s56 = int_to_ptr.vmem [resolvable:$true] %s55
      %61 = dma.hbm_to_vmem [thread:$0]  %s3, 3072, %s56, [#allocation8], 192, 192, 12
    $region17: #{decoder_gru_forward.1} parent=1 // pred_fallthru
      _
    // Predicated region
    $region18: #{decoder_gru_forward.1} parent=1 // pred_check
      _
    $region19: #{decoder_gru_forward.1} parent=1 // pred_check_branch
      %63 = sbr.rel (0) target = $region21
    $region20: #{decoder_gru_forward.1} parent=1 // pred_region
      %s65 = ssub.s32 3072, 3072
      %66 = vsyncadd [#allocation8], %s65
      %s67 = sshll.u32 [#allocation9], 4
      %s68 = int_to_ptr.vmem [resolvable:$true] %s67
      %73 = dma.hbm_to_vmem [thread:$0]  %s4, 3072, %s68, [#allocation8], 192, 192, 12
    $region21: #{decoder_gru_forward.1} parent=1 // pred_fallthru
      _
    // Predicated region
    $region22: #{decoder_gru_forward.1} parent=1 // pred_check
      _
    $region23: #{decoder_gru_forward.1} parent=1 // pred_check_branch
      %75 = sbr.rel (0) target = $region25
    $region24: #{decoder_gru_forward.1} parent=1 // pred_region
      %s77 = ssub.s32 48, 48
      %78 = vsyncadd [#allocation11], %s77
      %s80 = sshll.u32 [#allocation10], 4
      %s81 = int_to_ptr.vmem [resolvable:$true] %s80
      %83 = dma.hbm_to_vmem [thread:$0]  %s5, 48, %s81, [#allocation11]
    $region25: #{decoder_gru_forward.1} parent=1 // pred_fallthru
      _
    // Predicated region
    $region26: #{decoder_gru_forward.1} parent=1 // pred_check
      _
    $region27: #{decoder_gru_forward.1} parent=1 // pred_check_branch
      %85 = sbr.rel (0) target = $region29
    $region28: #{decoder_gru_forward.1} parent=1 // pred_region
      %s87 = ssub.s32 48, 48
      %88 = vsyncadd [#allocation11], %s87
      %s90 = sshll.u32 [#allocation12], 4
      %s91 = int_to_ptr.vmem [resolvable:$true] %s90
      %93 = dma.hbm_to_vmem [thread:$0]  %s6, 48, %s91, [#allocation11]
    $region29: #{decoder_gru_forward.1} parent=1 // pred_fallthru
      _
    // Predicated region
    $region30: #{decoder_gru_forward.1} parent=1 // pred_check
      _
    $region31: #{decoder_gru_forward.1} parent=1 // pred_check_branch
      %95 = sbr.rel (0) target = $region33
    $region32: #{decoder_gru_forward.1} parent=1 // pred_region
      %s97 = ssub.s32 3072, 3072
      %98 = vsyncadd [#allocation14], %s97
      %s99 = sshll.u32 [#allocation13], 4
      %s100 = int_to_ptr.vmem [resolvable:$true] %s99
      %105 = dma.hbm_to_vmem [thread:$0]  %s7, 3072, %s100, [#allocation14], 192, 192, 12
    $region33: #{decoder_gru_forward.1} parent=1 // pred_fallthru
      _
    // Predicated region
    $region34: #{decoder_gru_forward.1} parent=1 // pred_check
      _
    $region35: #{decoder_gru_forward.1} parent=1 // pred_check_branch
      %107 = sbr.rel (0) target = $region37
    $region36: #{decoder_gru_forward.1} parent=1 // pred_region
      %s109 = ssub.s32 3072, 3072
      %110 = vsyncadd [#allocation14], %s109
      %s111 = sshll.u32 [#allocation15], 4
      %s112 = int_to_ptr.vmem [resolvable:$true] %s111
      %117 = dma.hbm_to_vmem [thread:$0]  %s8, 3072, %s112, [#allocation14], 192, 192, 12
    $region37: #{decoder_gru_forward.1} parent=1 // pred_fallthru
      _
    // Predicated region
    $region38: #{decoder_gru_forward.1} parent=1 // pred_check
      _
    $region39: #{decoder_gru_forward.1} parent=1 // pred_check_branch
      %119 = sbr.rel (0) target = $region41
    $region40: #{decoder_gru_forward.1} parent=1 // pred_region
      %s121 = ssub.s32 48, 48
      %122 = vsyncadd [#allocation17], %s121
      %s124 = sshll.u32 [#allocation16], 4
      %s125 = int_to_ptr.vmem [resolvable:$true] %s124
      %127 = dma.hbm_to_vmem [thread:$0]  %s9, 48, %s125, [#allocation17]
    $region41: #{decoder_gru_forward.1} parent=1 // pred_fallthru
      _
    // Predicated region
    $region42: #{decoder_gru_forward.1} parent=1 // pred_check
      _
    $region43: #{decoder_gru_forward.1} parent=1 // pred_check_branch
      %129 = sbr.rel (0) target = $region45
    $region44: #{decoder_gru_forward.1} parent=1 // pred_region
      %s131 = ssub.s32 48, 48
      %132 = vsyncadd [#allocation17], %s131
      %s134 = sshll.u32 [#allocation18], 4
      %s135 = int_to_ptr.vmem [resolvable:$true] %s134
      %137 = dma.hbm_to_vmem [thread:$0]  %s10, 48, %s135, [#allocation17]
    $region45: #{decoder_gru_forward.1} parent=1 // pred_fallthru
      _
    // Predicated region
    $region46: #{decoder_gru_forward.1} parent=1 // pred_check
      _
    $region47: #{decoder_gru_forward.1} parent=1 // pred_check_branch
      %139 = sbr.rel (0) target = $region49
    $region48: #{decoder_gru_forward.1} parent=1 // pred_region
      _
    $region49: #{decoder_gru_forward.1} parent=1 // pred_fallthru
      _
    // Predicated region
    $region50: #{decoder_gru_forward.1} parent=1 // pred_check
      _
    $region51: #{decoder_gru_forward.1} parent=1 // pred_check_branch
      %141 = sbr.rel (0) target = $region53
    $region52: #{decoder_gru_forward.1} parent=1 // pred_region
      _
    $region53: #{decoder_gru_forward.1} parent=1 // pred_fallthru
      _
    // Predicated region
    $region54: #{decoder_gru_forward.1} parent=1 // pred_check
      _
    $region55: #{decoder_gru_forward.1} parent=1 // pred_check_branch
      %143 = sbr.rel (0) target = $region57
    $region56: #{decoder_gru_forward.1} parent=1 // pred_region
      %144 = dma.done [#allocation5], 16
    $region57: #{decoder_gru_forward.1} parent=1 // pred_fallthru
      _
    // Predicated region
    $region58: #{decoder_gru_forward.1} parent=1 // pred_check
      _
    $region59: #{decoder_gru_forward.1} parent=1 // pred_check_branch
      %146 = sbr.rel (0) target = $region61
    $region60: #{decoder_gru_forward.1} parent=1 // pred_region
      %147 = dma.done [#allocation4], 256
    $region61: #{decoder_gru_forward.1} parent=1 // pred_fallthru
      _
    // Predicated region
    $region62: #{decoder_gru_forward.1} parent=1 // pred_check
      _
    $region63: #{decoder_gru_forward.1} parent=1 // pred_check_branch
      %149 = sbr.rel (0) target = $region65
    $region64: #{decoder_gru_forward.1} parent=1 // pred_region
      %150 = dma.done [#allocation8], 3072
    $region65: #{decoder_gru_forward.1} parent=1 // pred_fallthru
      _
    // Predicated region
    $region66: #{decoder_gru_forward.1} parent=1 // pred_check
      _
    $region67: #{decoder_gru_forward.1} parent=1 // pred_check_branch
      %152 = sbr.rel (0) target = $region69
    $region68: #{decoder_gru_forward.1} parent=1 // pred_region
      %153 = dma.done [#allocation8], 3072
    $region69: #{decoder_gru_forward.1} parent=1 // pred_fallthru
      _
    // Predicated region
    $region70: #{decoder_gru_forward.1} parent=1 // pred_check
      _
    $region71: #{decoder_gru_forward.1} parent=1 // pred_check_branch
      %155 = sbr.rel (0) target = $region73
    $region72: #{decoder_gru_forward.1} parent=1 // pred_region
      %156 = dma.done [#allocation11], 48
    $region73: #{decoder_gru_forward.1} parent=1 // pred_fallthru
      _
    // Predicated region
    $region74: #{decoder_gru_forward.1} parent=1 // pred_check
      _
    $region75: #{decoder_gru_forward.1} parent=1 // pred_check_branch
      %158 = sbr.rel (0) target = $region77
    $region76: #{decoder_gru_forward.1} parent=1 // pred_region
      %159 = dma.done [#allocation11], 48
    $region77: #{decoder_gru_forward.1} parent=1 // pred_fallthru
      _
    // Predicated region
    $region78: #{decoder_gru_forward.1} parent=1 // pred_check
      _
    $region79: #{decoder_gru_forward.1} parent=1 // pred_check_branch
      %161 = sbr.rel (0) target = $region81
    $region80: #{decoder_gru_forward.1} parent=1 // pred_region
      %162 = dma.done [#allocation14], 3072
    $region81: #{decoder_gru_forward.1} parent=1 // pred_fallthru
      _
    // Predicated region
    $region82: #{decoder_gru_forward.1} parent=1 // pred_check
      _
    $region83: #{decoder_gru_forward.1} parent=1 // pred_check_branch
      %164 = sbr.rel (0) target = $region85
    $region84: #{decoder_gru_forward.1} parent=1 // pred_region
      %165 = dma.done [#allocation14], 3072
    $region85: #{decoder_gru_forward.1} parent=1 // pred_fallthru
      _
    // Predicated region
    $region86: #{decoder_gru_forward.1} parent=1 // pred_check
      _
    $region87: #{decoder_gru_forward.1} parent=1 // pred_check_branch
      %167 = sbr.rel (0) target = $region89
    $region88: #{decoder_gru_forward.1} parent=1 // pred_region
      %168 = dma.done [#allocation17], 48
    $region89: #{decoder_gru_forward.1} parent=1 // pred_fallthru
      _
    // Predicated region
    $region90: #{decoder_gru_forward.1} parent=1 // pred_check
      _
    $region91: #{decoder_gru_forward.1} parent=1 // pred_check_branch
      %170 = sbr.rel (0) target = $region93
    $region92: #{decoder_gru_forward.1} parent=1 // pred_region
      %171 = dma.done [#allocation17], 48
    $region93: #{decoder_gru_forward.1} parent=1 // pred_fallthru
      _
    %172 = sfence
    %s174 = sld [smem:[#allocation3]]
    %s175 = scalar_lea.vmem [#allocation6], %s174
    %v176 = vld [vmem:[%s175] sm:$0x1]
    %177 = vst [vmem:[#allocation2] sm:$0x1] %v176
    %s178 = sld [smem:[#allocation3 + $0x1]]
    %s179 = scalar_lea.vmem [#allocation6], %s178
    %v180 = vld [vmem:[%s179] sm:$0x1]
    %181 = vst [vmem:[#allocation2 + $0x1] sm:$0x1] %v180
    %s182 = sld [smem:[#allocation3 + $0x2]]
    %s183 = scalar_lea.vmem [#allocation6], %s182
    %v184 = vld [vmem:[%s183] sm:$0x1]
    %185 = vst [vmem:[#allocation2 + $0x2] sm:$0x1] %v184
    %s186 = sld [smem:[#allocation3 + $0x3]]
    %s187 = scalar_lea.vmem [#allocation6], %s186
    %v188 = vld [vmem:[%s187] sm:$0x1]
    %189 = vst [vmem:[#allocation2 + $0x3] sm:$0x1] %v188
    %s190 = sld [smem:[#allocation3 + $0x4]]
    %s191 = scalar_lea.vmem [#allocation6], %s190
    %v192 = vld [vmem:[%s191] sm:$0x1]
    %193 = vst [vmem:[#allocation2 + $0x4] sm:$0x1] %v192
    %s194 = sld [smem:[#allocation3 + $0x5]]
    %s195 = scalar_lea.vmem [#allocation6], %s194
    %v196 = vld [vmem:[%s195] sm:$0x1]
    %197 = vst [vmem:[#allocation2 + $0x5] sm:$0x1] %v196
    %s198 = sld [smem:[#allocation3 + $0x6]]
    %s199 = scalar_lea.vmem [#allocation6], %s198
    %v200 = vld [vmem:[%s199] sm:$0x1]
    %201 = vst [vmem:[#allocation2 + $0x6] sm:$0x1] %v200
    %s202 = sld [smem:[#allocation3 + $0x7]]
    %s203 = scalar_lea.vmem [#allocation6], %s202
    %v204 = vld [vmem:[%s203] sm:$0x1]
    %205 = vst [vmem:[#allocation2 + $0x7] sm:$0x1] %v204
    %v206 = vld [vmem:[#allocation2] sm:$0xff]
    %v207 = vld [vmem:[#allocation7] sm:$0xff]
    %v208 = vld [vmem:[#allocation7 + $0x8] sm:$0xf]
    %v209 = vld [vmem:[#allocation7 + $0xc] sm:$0xff]
    %v210 = vld [vmem:[#allocation7 + $0x14] sm:$0xf]
    %v211 = vld [vmem:[#allocation7 + $0x18] sm:$0xff]
    %v212 = vld [vmem:[#allocation7 + $0x20] sm:$0xf]
    %v213 = vld [vmem:[#allocation7 + $0x24] sm:$0xff]
    %v214 = vld [vmem:[#allocation7 + $0x2c] sm:$0xf]
    %v215 = vld [vmem:[#allocation7 + $0x30] sm:$0xff]
    %v216 = vld [vmem:[#allocation7 + $0x38] sm:$0xf]
    %v217 = vld [vmem:[#allocation7 + $0x3c] sm:$0xff]
    %v218 = vld [vmem:[#allocation7 + $0x44] sm:$0xf]
    %v219 = vld [vmem:[#allocation7 + $0x48] sm:$0xff]
    %v220 = vld [vmem:[#allocation7 + $0x50] sm:$0xf]
    %v221 = vld [vmem:[#allocation7 + $0x54] sm:$0xff]
    %v222 = vld [vmem:[#allocation7 + $0x5c] sm:$0xf]
    %v223 = vld [vmem:[#allocation7 + $0x60] sm:$0xff]
    %v224 = vld [vmem:[#allocation7 + $0x68] sm:$0xf]
    %v225 = vld [vmem:[#allocation7 + $0x6c] sm:$0xff]
    %v226 = vld [vmem:[#allocation7 + $0x74] sm:$0xf]
    %v227 = vld [vmem:[#allocation7 + $0x78] sm:$0xff]
    %v228 = vld [vmem:[#allocation7 + $0x80] sm:$0xf]
    %v229 = vld [vmem:[#allocation7 + $0x84] sm:$0xff]
    %v230 = vld [vmem:[#allocation7 + $0x8c] sm:$0xf]
    %v231 = vld [vmem:[#allocation7 + $0x90] sm:$0xff]
    %v232 = vld [vmem:[#allocation7 + $0x98] sm:$0xf]
    %v233 = vld [vmem:[#allocation7 + $0x9c] sm:$0xff]
    %v234 = vld [vmem:[#allocation7 + $0xa4] sm:$0xf]
    %v235 = vld [vmem:[#allocation7 + $0xa8] sm:$0xff]
    %v236 = vld [vmem:[#allocation7 + $0xb0] sm:$0xf]
    %v237 = vld [vmem:[#allocation7 + $0xb4] sm:$0xff]
    %v238 = vld [vmem:[#allocation7 + $0xbc] sm:$0xf]
    %v239 = vld [vmem:[#allocation9] sm:$0xff]
    %v240 = vld [vmem:[#allocation9 + $0x8] sm:$0xf]
    %v241 = vld [vmem:[#allocation9 + $0xc] sm:$0xff]
    %v242 = vld [vmem:[#allocation9 + $0x14] sm:$0xf]
    %v243 = vld [vmem:[#allocation9 + $0x18] sm:$0xff]
    %v244 = vld [vmem:[#allocation9 + $0x20] sm:$0xf]
    %v245 = vld [vmem:[#allocation9 + $0x24] sm:$0xff]
    %v246 = vld [vmem:[#allocation9 + $0x2c] sm:$0xf]
    %v247 = vld [vmem:[#allocation9 + $0x30] sm:$0xff]
    %v248 = vld [vmem:[#allocation9 + $0x38] sm:$0xf]
    %v249 = vld [vmem:[#allocation9 + $0x3c] sm:$0xff]
    %v250 = vld [vmem:[#allocation9 + $0x44] sm:$0xf]
    %v251 = vld [vmem:[#allocation9 + $0x48] sm:$0xff]
    %v252 = vld [vmem:[#allocation9 + $0x50] sm:$0xf]
    %v253 = vld [vmem:[#allocation9 + $0x54] sm:$0xff]
    %v254 = vld [vmem:[#allocation9 + $0x5c] sm:$0xf]
    %v255 = vld [vmem:[#allocation9 + $0x60] sm:$0xff]
    %v256 = vld [vmem:[#allocation9 + $0x68] sm:$0xf]
    %v257 = vld [vmem:[#allocation9 + $0x6c] sm:$0xff]
    %v258 = vld [vmem:[#allocation9 + $0x74] sm:$0xf]
    %v259 = vld [vmem:[#allocation9 + $0x78] sm:$0xff]
    %v260 = vld [vmem:[#allocation9 + $0x80] sm:$0xf]
    %v261 = vld [vmem:[#allocation9 + $0x84] sm:$0xff]
    %v262 = vld [vmem:[#allocation9 + $0x8c] sm:$0xf]
    %v263 = vld [vmem:[#allocation9 + $0x90] sm:$0xff]
    %v264 = vld [vmem:[#allocation9 + $0x98] sm:$0xf]
    %v265 = vld [vmem:[#allocation9 + $0x9c] sm:$0xff]
    %v266 = vld [vmem:[#allocation9 + $0xa4] sm:$0xf]
    %v267 = vld [vmem:[#allocation9 + $0xa8] sm:$0xff]
    %v268 = vld [vmem:[#allocation9 + $0xb0] sm:$0xf]
    %v269 = vld [vmem:[#allocation9 + $0xb4] sm:$0xff]
    %v270 = vld [vmem:[#allocation9 + $0xbc] sm:$0xf]
    %v271 = vld [vmem:[#allocation10] sm:$0x7]
    %v272 = vld [vmem:[#allocation12] sm:$0x7]
    %v273 = vld [vmem:[%s2] sm:$0xff]
    %v274 = vpack.c.bf16 %v206, %v206
    %v276 = vlaneseq
    %v277 = vshrl.u32 %v276, 7
    %v278 = vsub.s32 0, %v277
    %v279 = vrot.slane %v271, %v278
    %v280 = vlaneseq
    %v281 = vshrl.u32 %v280, 7
    %v282 = vsub.s32 1, %v281
    %v283 = vrot.slane %v271, %v282
    %v284 = vlaneseq
    %v285 = vshrl.u32 %v284, 7
    %v286 = vsub.s32 2, %v285
    %v287 = vrot.slane %v271, %v286
    %v323 = vunpack.c.l.b16 %v207
    %v324 = vunpack.c.h.b16 %v207
    %v325 = vunpack.c.l.b16 %v208
    %v326 = vunpack.c.l.b16 %v209
    %v327 = vunpack.c.h.b16 %v209
    %v328 = vunpack.c.l.b16 %v210
    %v329 = vunpack.c.l.b16 %v211
    %v330 = vunpack.c.h.b16 %v211
    %v331 = vunpack.c.l.b16 %v212
    %v332 = vunpack.c.l.b16 %v213
    %v333 = vunpack.c.h.b16 %v213
    %v334 = vunpack.c.l.b16 %v214
    %v335 = vunpack.c.l.b16 %v215
    %v336 = vunpack.c.h.b16 %v215
    %v337 = vunpack.c.l.b16 %v216
    %v338 = vunpack.c.l.b16 %v217
    %v339 = vunpack.c.h.b16 %v217
    %v340 = vunpack.c.l.b16 %v218
    %v341 = vunpack.c.l.b16 %v219
    %v342 = vunpack.c.h.b16 %v219
    %v343 = vunpack.c.l.b16 %v220
    %v344 = vunpack.c.l.b16 %v221
    %v345 = vunpack.c.h.b16 %v221
    %v346 = vunpack.c.l.b16 %v222
    %v347 = vunpack.c.l.b16 %v223
    %v348 = vunpack.c.h.b16 %v223
    %v349 = vunpack.c.l.b16 %v224
    %v350 = vunpack.c.l.b16 %v225
    %v351 = vunpack.c.h.b16 %v225
    %v352 = vunpack.c.l.b16 %v226
    %v353 = vunpack.c.l.b16 %v227
    %v354 = vunpack.c.h.b16 %v227
    %v355 = vunpack.c.l.b16 %v228
    %v356 = vunpack.c.l.b16 %v229
    %v357 = vunpack.c.h.b16 %v229
    %v358 = vunpack.c.l.b16 %v230
    %v359 = vunpack.c.l.b16 %v231
    %v360 = vunpack.c.h.b16 %v231
    %v361 = vunpack.c.l.b16 %v232
    %v362 = vunpack.c.l.b16 %v233
    %v363 = vunpack.c.h.b16 %v233
    %v364 = vunpack.c.l.b16 %v234
    %v365 = vunpack.c.l.b16 %v235
    %v366 = vunpack.c.h.b16 %v235
    %v367 = vunpack.c.l.b16 %v236
    %v368 = vunpack.c.l.b16 %v237
    %v369 = vunpack.c.h.b16 %v237
    %v370 = vunpack.c.l.b16 %v238
    %v371 = vpack.c.b16 %v326, %v323
    %v372 = vpack.c.b16 %v327, %v324
    %v373 = vpack.c.b16 %v328, %v325
    %v374 = vpack.c.b16 %v332, %v329
    %v375 = vpack.c.b16 %v333, %v330
    %v376 = vpack.c.b16 %v334, %v331
    %v377 = vpack.c.b16 %v338, %v335
    %v378 = vpack.c.b16 %v339, %v336
    %v379 = vpack.c.b16 %v340, %v337
    %v380 = vpack.c.b16 %v344, %v341
    %v381 = vpack.c.b16 %v345, %v342
    %v382 = vpack.c.b16 %v346, %v343
    %v383 = vpack.c.b16 %v350, %v347
    %v384 = vpack.c.b16 %v351, %v348
    %v385 = vpack.c.b16 %v352, %v349
    %v386 = vpack.c.b16 %v356, %v353
    %v387 = vpack.c.b16 %v357, %v354
    %v388 = vpack.c.b16 %v358, %v355
    %v389 = vpack.c.b16 %v362, %v359
    %v390 = vpack.c.b16 %v363, %v360
    %v391 = vpack.c.b16 %v364, %v361
    %v392 = vpack.c.b16 %v368, %v365
    %v393 = vpack.c.b16 %v369, %v366
    %v394 = vpack.c.b16 %v370, %v367
    %419 = vmatprep.subr.bf16.mxu0 %v372
    %420 = vmatpush1.bf16.msra.mxu0 %v371
    %421 = vmatprep.subr.bf16.mxu0 %v375
    %422 = vmatpush1.bf16.msra.mxu0 %v374
    %423 = vmatprep.subr.bf16.mxu0 %v378
    %424 = vmatpush1.bf16.msra.mxu0 %v377
    %425 = vmatprep.subr.bf16.mxu0 %v381
    %426 = vmatpush1.bf16.msra.mxu0 %v380
    %427 = vmatprep.subr.bf16.mxu0 %v384
    %428 = vmatpush1.bf16.msra.mxu0 %v383
    %429 = vmatprep.subr.bf16.mxu0 %v387
    %430 = vmatpush1.bf16.msra.mxu0 %v386
    %431 = vmatprep.subr.bf16.mxu0 %v390
    %432 = vmatpush1.bf16.msra.mxu0 %v389
    %433 = vmatprep.subr.bf16.mxu0 %v393
    %434 = vmatpush1.bf16.msra.mxu0 %v392
    %435 = vmatprep.subr.bf16.mxu0 0
    %436 = vmatpush1.bf16.msra.mxu0 0
    %437 = vmatprep.subr.bf16.mxu0 0
    %438 = vmatpush1.bf16.msra.mxu0 0
    %439 = vmatprep.subr.bf16.mxu0 0
    %440 = vmatpush1.bf16.msra.mxu0 0
    %441 = vmatprep.subr.bf16.mxu0 0
    %442 = vmatpush1.bf16.msra.mxu0 0
    %443 = vmatprep.subr.bf16.mxu0 0
    %444 = vmatpush1.bf16.msra.mxu0 0
    %445 = vmatprep.subr.bf16.mxu0 0
    %446 = vmatpush1.bf16.msra.mxu0 0
    %447 = vmatprep.subr.bf16.mxu0 0
    %448 = vmatpush1.bf16.msra.mxu0 0
    %449 = vmatprep.subr.bf16.mxu0 0
    %450 = vmatpush1.bf16.msra.mxu0 0
    %451 = vmatprep.mubr.bf16.mxu0 0
    %452 = vmatmul.mubr.bf16.gmra.mrb[0].mxu0 %v274
    %v453 = vpop.f32.mrb[0].mxu0
    %v454 = vadd.f32 %v279, %v453
    %v455 = vpop.f32.mrb[0].mxu0
    %v456 = vadd.f32 %v283, %v455
    %v457 = vpop.f32.mrb[0].mxu0
    %v458 = vpop.f32.mrb[0].mxu0
    %459 = vdwg.mxu0
    %460 = vmatprep.subr.bf16.mxu0 0
    %461 = vmatpush1.bf16.msra.mxu0 %v373
    %462 = vmatprep.subr.bf16.mxu0 0
    %463 = vmatpush1.bf16.msra.mxu0 %v376
    %464 = vmatprep.subr.bf16.mxu0 0
    %465 = vmatpush1.bf16.msra.mxu0 %v379
    %466 = vmatprep.subr.bf16.mxu0 0
    %467 = vmatpush1.bf16.msra.mxu0 %v382
    %468 = vmatprep.subr.bf16.mxu0 0
    %469 = vmatpush1.bf16.msra.mxu0 %v385
    %470 = vmatprep.subr.bf16.mxu0 0
    %471 = vmatpush1.bf16.msra.mxu0 %v388
    %472 = vmatprep.subr.bf16.mxu0 0
    %473 = vmatpush1.bf16.msra.mxu0 %v391
    %474 = vmatprep.subr.bf16.mxu0 0
    %475 = vmatpush1.bf16.msra.mxu0 %v394
    %476 = vmatprep.subr.bf16.mxu0 0
    %477 = vmatpush1.bf16.msra.mxu0 0
    %478 = vmatprep.subr.bf16.mxu0 0
    %479 = vmatpush1.bf16.msra.mxu0 0
    %480 = vmatprep.subr.bf16.mxu0 0
    %481 = vmatpush1.bf16.msra.mxu0 0
    %482 = vmatprep.subr.bf16.mxu0 0
    %483 = vmatpush1.bf16.msra.mxu0 0
    %484 = vmatprep.subr.bf16.mxu0 0
    %485 = vmatpush1.bf16.msra.mxu0 0
    %486 = vmatprep.subr.bf16.mxu0 0
    %487 = vmatpush1.bf16.msra.mxu0 0
    %488 = vmatprep.subr.bf16.mxu0 0
    %489 = vmatpush1.bf16.msra.mxu0 0
    %490 = vmatprep.subr.bf16.mxu0 0
    %491 = vmatpush1.bf16.msra.mxu0 0
    %492 = vmatprep.mubr.bf16.mxu0 0
    %493 = vmatmul.mubr.bf16.gmra.mrb[0].mxu0 %v274
    %v494 = vpop.f32.mrb[0].mxu0
    %v495 = vadd.f32 %v287, %v494
    %v496 = vpop.f32.mrb[0].mxu0
    %v497 = vpop.f32.mrb[0].mxu0
    %v498 = vpop.f32.mrb[0].mxu0
    %499 = vdwg.mxu0
    %v500 = vpack.c.bf16 %v273, %v273
    %v502 = vlaneseq
    %v503 = vshrl.u32 %v502, 7
    %v504 = vsub.s32 0, %v503
    %v505 = vrot.slane %v272, %v504
    %v506 = vlaneseq
    %v507 = vshrl.u32 %v506, 7
    %v508 = vsub.s32 1, %v507
    %v509 = vrot.slane %v272, %v508
    %v510 = vlaneseq
    %v511 = vshrl.u32 %v510, 7
    %v512 = vsub.s32 2, %v511
    %v513 = vrot.slane %v272, %v512
    %v549 = vunpack.c.l.b16 %v239
    %v550 = vunpack.c.h.b16 %v239
    %v551 = vunpack.c.l.b16 %v240
    %v552 = vunpack.c.l.b16 %v241
    %v553 = vunpack.c.h.b16 %v241
    %v554 = vunpack.c.l.b16 %v242
    %v555 = vunpack.c.l.b16 %v243
    %v556 = vunpack.c.h.b16 %v243
    %v557 = vunpack.c.l.b16 %v244
    %v558 = vunpack.c.l.b16 %v245
    %v559 = vunpack.c.h.b16 %v245
    %v560 = vunpack.c.l.b16 %v246
    %v561 = vunpack.c.l.b16 %v247
    %v562 = vunpack.c.h.b16 %v247
    %v563 = vunpack.c.l.b16 %v248
    %v564 = vunpack.c.l.b16 %v249
    %v565 = vunpack.c.h.b16 %v249
    %v566 = vunpack.c.l.b16 %v250
    %v567 = vunpack.c.l.b16 %v251
    %v568 = vunpack.c.h.b16 %v251
    %v569 = vunpack.c.l.b16 %v252
    %v570 = vunpack.c.l.b16 %v253
    %v571 = vunpack.c.h.b16 %v253
    %v572 = vunpack.c.l.b16 %v254
    %v573 = vunpack.c.l.b16 %v255
    %v574 = vunpack.c.h.b16 %v255
    %v575 = vunpack.c.l.b16 %v256
    %v576 = vunpack.c.l.b16 %v257
    %v577 = vunpack.c.h.b16 %v257
    %v578 = vunpack.c.l.b16 %v258
    %v579 = vunpack.c.l.b16 %v259
    %v580 = vunpack.c.h.b16 %v259
    %v581 = vunpack.c.l.b16 %v260
    %v582 = vunpack.c.l.b16 %v261
    %v583 = vunpack.c.h.b16 %v261
    %v584 = vunpack.c.l.b16 %v262
    %v585 = vunpack.c.l.b16 %v263
    %v586 = vunpack.c.h.b16 %v263
    %v587 = vunpack.c.l.b16 %v264
    %v588 = vunpack.c.l.b16 %v265
    %v589 = vunpack.c.h.b16 %v265
    %v590 = vunpack.c.l.b16 %v266
    %v591 = vunpack.c.l.b16 %v267
    %v592 = vunpack.c.h.b16 %v267
    %v593 = vunpack.c.l.b16 %v268
    %v594 = vunpack.c.l.b16 %v269
    %v595 = vunpack.c.h.b16 %v269
    %v596 = vunpack.c.l.b16 %v270
    %v597 = vpack.c.b16 %v552, %v549
    %v598 = vpack.c.b16 %v553, %v550
    %v599 = vpack.c.b16 %v554, %v551
    %v600 = vpack.c.b16 %v558, %v555
    %v601 = vpack.c.b16 %v559, %v556
    %v602 = vpack.c.b16 %v560, %v557
    %v603 = vpack.c.b16 %v564, %v561
    %v604 = vpack.c.b16 %v565, %v562
    %v605 = vpack.c.b16 %v566, %v563
    %v606 = vpack.c.b16 %v570, %v567
    %v607 = vpack.c.b16 %v571, %v568
    %v608 = vpack.c.b16 %v572, %v569
    %v609 = vpack.c.b16 %v576, %v573
    %v610 = vpack.c.b16 %v577, %v574
    %v611 = vpack.c.b16 %v578, %v575
    %v612 = vpack.c.b16 %v582, %v579
    %v613 = vpack.c.b16 %v583, %v580
    %v614 = vpack.c.b16 %v584, %v581
    %v615 = vpack.c.b16 %v588, %v585
    %v616 = vpack.c.b16 %v589, %v586
    %v617 = vpack.c.b16 %v590, %v587
    %v618 = vpack.c.b16 %v594, %v591
    %v619 = vpack.c.b16 %v595, %v592
    %v620 = vpack.c.b16 %v596, %v593
    %645 = vmatprep.subr.bf16.mxu0 %v598
    %646 = vmatpush1.bf16.msra.mxu0 %v597
    %647 = vmatprep.subr.bf16.mxu0 %v601
    %648 = vmatpush1.bf16.msra.mxu0 %v600
    %649 = vmatprep.subr.bf16.mxu0 %v604
    %650 = vmatpush1.bf16.msra.mxu0 %v603
    %651 = vmatprep.subr.bf16.mxu0 %v607
    %652 = vmatpush1.bf16.msra.mxu0 %v606
    %653 = vmatprep.subr.bf16.mxu0 %v610
    %654 = vmatpush1.bf16.msra.mxu0 %v609
    %655 = vmatprep.subr.bf16.mxu0 %v613
    %656 = vmatpush1.bf16.msra.mxu0 %v612
    %657 = vmatprep.subr.bf16.mxu0 %v616
    %658 = vmatpush1.bf16.msra.mxu0 %v615
    %659 = vmatprep.subr.bf16.mxu0 %v619
    %660 = vmatpush1.bf16.msra.mxu0 %v618
    %661 = vmatprep.subr.bf16.mxu0 0
    %662 = vmatpush1.bf16.msra.mxu0 0
    %663 = vmatprep.subr.bf16.mxu0 0
    %664 = vmatpush1.bf16.msra.mxu0 0
    %665 = vmatprep.subr.bf16.mxu0 0
    %666 = vmatpush1.bf16.msra.mxu0 0
    %667 = vmatprep.subr.bf16.mxu0 0
    %668 = vmatpush1.bf16.msra.mxu0 0
    %669 = vmatprep.subr.bf16.mxu0 0
    %670 = vmatpush1.bf16.msra.mxu0 0
    %671 = vmatprep.subr.bf16.mxu0 0
    %672 = vmatpush1.bf16.msra.mxu0 0
    %673 = vmatprep.subr.bf16.mxu0 0
    %674 = vmatpush1.bf16.msra.mxu0 0
    %675 = vmatprep.subr.bf16.mxu0 0
    %676 = vmatpush1.bf16.msra.mxu0 0
    %677 = vmatprep.mubr.bf16.mxu0 0
    %678 = vmatmul.mubr.bf16.gmra.mrb[0].mxu0 %v500
    %v679 = vpop.f32.mrb[0].mxu0
    %v680 = vadd.f32 %v505, %v679
    %v681 = vpop.f32.mrb[0].mxu0
    %v682 = vadd.f32 %v509, %v681
    %v683 = vpop.f32.mrb[0].mxu0
    %v684 = vpop.f32.mrb[0].mxu0
    %685 = vdwg.mxu0
    %686 = vmatprep.subr.bf16.mxu0 0
    %687 = vmatpush1.bf16.msra.mxu0 %v599
    %688 = vmatprep.subr.bf16.mxu0 0
    %689 = vmatpush1.bf16.msra.mxu0 %v602
    %690 = vmatprep.subr.bf16.mxu0 0
    %691 = vmatpush1.bf16.msra.mxu0 %v605
    %692 = vmatprep.subr.bf16.mxu0 0
    %693 = vmatpush1.bf16.msra.mxu0 %v608
    %694 = vmatprep.subr.bf16.mxu0 0
    %695 = vmatpush1.bf16.msra.mxu0 %v611
    %696 = vmatprep.subr.bf16.mxu0 0
    %697 = vmatpush1.bf16.msra.mxu0 %v614
    %698 = vmatprep.subr.bf16.mxu0 0
    %699 = vmatpush1.bf16.msra.mxu0 %v617
    %700 = vmatprep.subr.bf16.mxu0 0
    %701 = vmatpush1.bf16.msra.mxu0 %v620
    %702 = vmatprep.subr.bf16.mxu0 0
    %703 = vmatpush1.bf16.msra.mxu0 0
    %704 = vmatprep.subr.bf16.mxu0 0
    %705 = vmatpush1.bf16.msra.mxu0 0
    %706 = vmatprep.subr.bf16.mxu0 0
    %707 = vmatpush1.bf16.msra.mxu0 0
    %708 = vmatprep.subr.bf16.mxu0 0
    %709 = vmatpush1.bf16.msra.mxu0 0
    %710 = vmatprep.subr.bf16.mxu0 0
    %711 = vmatpush1.bf16.msra.mxu0 0
    %712 = vmatprep.subr.bf16.mxu0 0
    %713 = vmatpush1.bf16.msra.mxu0 0
    %714 = vmatprep.subr.bf16.mxu0 0
    %715 = vmatpush1.bf16.msra.mxu0 0
    %716 = vmatprep.subr.bf16.mxu0 0
    %717 = vmatpush1.bf16.msra.mxu0 0
    %718 = vmatprep.mubr.bf16.mxu0 0
    %719 = vmatmul.mubr.bf16.gmra.mrb[0].mxu0 %v500
    %v720 = vpop.f32.mrb[0].mxu0
    %v721 = vadd.f32 %v513, %v720
    %v722 = vpop.f32.mrb[0].mxu0
    %v723 = vpop.f32.mrb[0].mxu0
    %v724 = vpop.f32.mrb[0].mxu0
    %725 = vdwg.mxu0
    %v726 = vadd.f32 %v454, %v680
    %v727 = vxor.u32 %v726, 2147483648
    %v728 = vmul.f32 %v727, 1.442695
    %v729 = vpow.pop %v728
    %v730 = vadd.f32 %v729, 1.0
    %v731 = vrcp.pop %v730
    %v732 = vmul.f32 1.0, %v731
    %v733 = vadd.f32 %v456, %v682
    %v734 = vxor.u32 %v733, 2147483648
    %v735 = vmul.f32 %v734, 1.442695
    %v736 = vpow.pop %v735
    %v737 = vadd.f32 %v736, 1.0
    %v738 = vrcp.pop %v737
    %v739 = vmul.f32 1.0, %v738
    %v740 = vmul.f32 %v732, %v721
    %v741 = vadd.f32 %v495, %v740
    %v742 = vtanh.pop %v741
    %v743 = vsub.f32 1.0, %v739
    %v744 = vmul.f32 %v743, %v742
    %v745 = vmul.f32 %v739, %v273
    %v746 = vadd.f32 %v744, %v745
    %747 = vst [vmem:[%s14] sm:$0xff] %v746
    %v748 = vld [vmem:[#allocation13] sm:$0xff]
    %v749 = vld [vmem:[#allocation13 + $0x8] sm:$0xf]
    %v750 = vld [vmem:[#allocation13 + $0xc] sm:$0xff]
    %v751 = vld [vmem:[#allocation13 + $0x14] sm:$0xf]
    %v752 = vld [vmem:[#allocation13 + $0x18] sm:$0xff]
    %v753 = vld [vmem:[#allocation13 + $0x20] sm:$0xf]
    %v754 = vld [vmem:[#allocation13 + $0x24] sm:$0xff]
    %v755 = vld [vmem:[#allocation13 + $0x2c] sm:$0xf]
    %v756 = vld [vmem:[#allocation13 + $0x30] sm:$0xff]
    %v757 = vld [vmem:[#allocation13 + $0x38] sm:$0xf]
    %v758 = vld [vmem:[#allocation13 + $0x3c] sm:$0xff]
    %v759 = vld [vmem:[#allocation13 + $0x44] sm:$0xf]
    %v760 = vld [vmem:[#allocation13 + $0x48] sm:$0xff]
    %v761 = vld [vmem:[#allocation13 + $0x50] sm:$0xf]
    %v762 = vld [vmem:[#allocation13 + $0x54] sm:$0xff]
    %v763 = vld [vmem:[#allocation13 + $0x5c] sm:$0xf]
    %v764 = vld [vmem:[#allocation13 + $0x60] sm:$0xff]
    %v765 = vld [vmem:[#allocation13 + $0x68] sm:$0xf]
    %v766 = vld [vmem:[#allocation13 + $0x6c] sm:$0xff]
    %v767 = vld [vmem:[#allocation13 + $0x74] sm:$0xf]
    %v768 = vld [vmem:[#allocation13 + $0x78] sm:$0xff]
    %v769 = vld [vmem:[#allocation13 + $0x80] sm:$0xf]
    %v770 = vld [vmem:[#allocation13 + $0x84] sm:$0xff]
    %v771 = vld [vmem:[#allocation13 + $0x8c] sm:$0xf]
    %v772 = vld [vmem:[#allocation13 + $0x90] sm:$0xff]
    %v773 = vld [vmem:[#allocation13 + $0x98] sm:$0xf]
    %v774 = vld [vmem:[#allocation13 + $0x9c] sm:$0xff]
    %v775 = vld [vmem:[#allocation13 + $0xa4] sm:$0xf]
    %v776 = vld [vmem:[#allocation13 + $0xa8] sm:$0xff]
    %v777 = vld [vmem:[#allocation13 + $0xb0] sm:$0xf]
    %v778 = vld [vmem:[#allocation13 + $0xb4] sm:$0xff]
    %v779 = vld [vmem:[#allocation13 + $0xbc] sm:$0xf]
    %v780 = vld [vmem:[#allocation15] sm:$0xff]
    %v781 = vld [vmem:[#allocation15 + $0x8] sm:$0xf]
    %v782 = vld [vmem:[#allocation15 + $0xc] sm:$0xff]
    %v783 = vld [vmem:[#allocation15 + $0x14] sm:$0xf]
    %v784 = vld [vmem:[#allocation15 + $0x18] sm:$0xff]
    %v785 = vld [vmem:[#allocation15 + $0x20] sm:$0xf]
    %v786 = vld [vmem:[#allocation15 + $0x24] sm:$0xff]
    %v787 = vld [vmem:[#allocation15 + $0x2c] sm:$0xf]
    %v788 = vld [vmem:[#allocation15 + $0x30] sm:$0xff]
    %v789 = vld [vmem:[#allocation15 + $0x38] sm:$0xf]
    %v790 = vld [vmem:[#allocation15 + $0x3c] sm:$0xff]
    %v791 = vld [vmem:[#allocation15 + $0x44] sm:$0xf]
    %v792 = vld [vmem:[#allocation15 + $0x48] sm:$0xff]
    %v793 = vld [vmem:[#allocation15 + $0x50] sm:$0xf]
    %v794 = vld [vmem:[#allocation15 + $0x54] sm:$0xff]
    %v795 = vld [vmem:[#allocation15 + $0x5c] sm:$0xf]
    %v796 = vld [vmem:[#allocation15 + $0x60] sm:$0xff]
    %v797 = vld [vmem:[#allocation15 + $0x68] sm:$0xf]
    %v798 = vld [vmem:[#allocation15 + $0x6c] sm:$0xff]
    %v799 = vld [vmem:[#allocation15 + $0x74] sm:$0xf]
    %v800 = vld [vmem:[#allocation15 + $0x78] sm:$0xff]
    %v801 = vld [vmem:[#allocation15 + $0x80] sm:$0xf]
    %v802 = vld [vmem:[#allocation15 + $0x84] sm:$0xff]
    %v803 = vld [vmem:[#allocation15 + $0x8c] sm:$0xf]
    %v804 = vld [vmem:[#allocation15 + $0x90] sm:$0xff]
    %v805 = vld [vmem:[#allocation15 + $0x98] sm:$0xf]
    %v806 = vld [vmem:[#allocation15 + $0x9c] sm:$0xff]
    %v807 = vld [vmem:[#allocation15 + $0xa4] sm:$0xf]
    %v808 = vld [vmem:[#allocation15 + $0xa8] sm:$0xff]
    %v809 = vld [vmem:[#allocation15 + $0xb0] sm:$0xf]
    %v810 = vld [vmem:[#allocation15 + $0xb4] sm:$0xff]
    %v811 = vld [vmem:[#allocation15 + $0xbc] sm:$0xf]
    %v812 = vld [vmem:[#allocation16] sm:$0x7]
    %v813 = vld [vmem:[#allocation18] sm:$0x7]
    %s814 = scalar_lea.vmem %s2, 8
    %v815 = vld [vmem:[%s814] sm:$0xff]
    %v816 = vpack.c.bf16 %v746, %v746
    %v818 = vlaneseq
    %v819 = vshrl.u32 %v818, 7
    %v820 = vsub.s32 0, %v819
    %v821 = vrot.slane %v812, %v820
    %v822 = vlaneseq
    %v823 = vshrl.u32 %v822, 7
    %v824 = vsub.s32 1, %v823
    %v825 = vrot.slane %v812, %v824
    %v826 = vlaneseq
    %v827 = vshrl.u32 %v826, 7
    %v828 = vsub.s32 2, %v827
    %v829 = vrot.slane %v812, %v828
    %v865 = vunpack.c.l.b16 %v748
    %v866 = vunpack.c.h.b16 %v748
    %v867 = vunpack.c.l.b16 %v749
    %v868 = vunpack.c.l.b16 %v750
    %v869 = vunpack.c.h.b16 %v750
    %v870 = vunpack.c.l.b16 %v751
    %v871 = vunpack.c.l.b16 %v752
    %v872 = vunpack.c.h.b16 %v752
    %v873 = vunpack.c.l.b16 %v753
    %v874 = vunpack.c.l.b16 %v754
    %v875 = vunpack.c.h.b16 %v754
    %v876 = vunpack.c.l.b16 %v755
    %v877 = vunpack.c.l.b16 %v756
    %v878 = vunpack.c.h.b16 %v756
    %v879 = vunpack.c.l.b16 %v757
    %v880 = vunpack.c.l.b16 %v758
    %v881 = vunpack.c.h.b16 %v758
    %v882 = vunpack.c.l.b16 %v759
    %v883 = vunpack.c.l.b16 %v760
    %v884 = vunpack.c.h.b16 %v760
    %v885 = vunpack.c.l.b16 %v761
    %v886 = vunpack.c.l.b16 %v762
    %v887 = vunpack.c.h.b16 %v762
    %v888 = vunpack.c.l.b16 %v763
    %v889 = vunpack.c.l.b16 %v764
    %v890 = vunpack.c.h.b16 %v764
    %v891 = vunpack.c.l.b16 %v765
    %v892 = vunpack.c.l.b16 %v766
    %v893 = vunpack.c.h.b16 %v766
    %v894 = vunpack.c.l.b16 %v767
    %v895 = vunpack.c.l.b16 %v768
    %v896 = vunpack.c.h.b16 %v768
    %v897 = vunpack.c.l.b16 %v769
    %v898 = vunpack.c.l.b16 %v770
    %v899 = vunpack.c.h.b16 %v770
    %v900 = vunpack.c.l.b16 %v771
    %v901 = vunpack.c.l.b16 %v772
    %v902 = vunpack.c.h.b16 %v772
    %v903 = vunpack.c.l.b16 %v773
    %v904 = vunpack.c.l.b16 %v774
    %v905 = vunpack.c.h.b16 %v774
    %v906 = vunpack.c.l.b16 %v775
    %v907 = vunpack.c.l.b16 %v776
    %v908 = vunpack.c.h.b16 %v776
    %v909 = vunpack.c.l.b16 %v777
    %v910 = vunpack.c.l.b16 %v778
    %v911 = vunpack.c.h.b16 %v778
    %v912 = vunpack.c.l.b16 %v779
    %v913 = vpack.c.b16 %v868, %v865
    %v914 = vpack.c.b16 %v869, %v866
    %v915 = vpack.c.b16 %v870, %v867
    %v916 = vpack.c.b16 %v874, %v871
    %v917 = vpack.c.b16 %v875, %v872
    %v918 = vpack.c.b16 %v876, %v873
    %v919 = vpack.c.b16 %v880, %v877
    %v920 = vpack.c.b16 %v881, %v878
    %v921 = vpack.c.b16 %v882, %v879
    %v922 = vpack.c.b16 %v886, %v883
    %v923 = vpack.c.b16 %v887, %v884
    %v924 = vpack.c.b16 %v888, %v885
    %v925 = vpack.c.b16 %v892, %v889
    %v926 = vpack.c.b16 %v893, %v890
    %v927 = vpack.c.b16 %v894, %v891
    %v928 = vpack.c.b16 %v898, %v895
    %v929 = vpack.c.b16 %v899, %v896
    %v930 = vpack.c.b16 %v900, %v897
    %v931 = vpack.c.b16 %v904, %v901
    %v932 = vpack.c.b16 %v905, %v902
    %v933 = vpack.c.b16 %v906, %v903
    %v934 = vpack.c.b16 %v910, %v907
    %v935 = vpack.c.b16 %v911, %v908
    %v936 = vpack.c.b16 %v912, %v909
    %961 = vmatprep.subr.bf16.mxu0 %v914
    %962 = vmatpush1.bf16.msra.mxu0 %v913
    %963 = vmatprep.subr.bf16.mxu0 %v917
    %964 = vmatpush1.bf16.msra.mxu0 %v916
    %965 = vmatprep.subr.bf16.mxu0 %v920
    %966 = vmatpush1.bf16.msra.mxu0 %v919
    %967 = vmatprep.subr.bf16.mxu0 %v923
    %968 = vmatpush1.bf16.msra.mxu0 %v922
    %969 = vmatprep.subr.bf16.mxu0 %v926
    %970 = vmatpush1.bf16.msra.mxu0 %v925
    %971 = vmatprep.subr.bf16.mxu0 %v929
    %972 = vmatpush1.bf16.msra.mxu0 %v928
    %973 = vmatprep.subr.bf16.mxu0 %v932
    %974 = vmatpush1.bf16.msra.mxu0 %v931
    %975 = vmatprep.subr.bf16.mxu0 %v935
    %976 = vmatpush1.bf16.msra.mxu0 %v934
    %977 = vmatprep.subr.bf16.mxu0 0
    %978 = vmatpush1.bf16.msra.mxu0 0
    %979 = vmatprep.subr.bf16.mxu0 0
    %980 = vmatpush1.bf16.msra.mxu0 0
    %981 = vmatprep.subr.bf16.mxu0 0
    %982 = vmatpush1.bf16.msra.mxu0 0
    %983 = vmatprep.subr.bf16.mxu0 0
    %984 = vmatpush1.bf16.msra.mxu0 0
    %985 = vmatprep.subr.bf16.mxu0 0
    %986 = vmatpush1.bf16.msra.mxu0 0
    %987 = vmatprep.subr.bf16.mxu0 0
    %988 = vmatpush1.bf16.msra.mxu0 0
    %989 = vmatprep.subr.bf16.mxu0 0
    %990 = vmatpush1.bf16.msra.mxu0 0
    %991 = vmatprep.subr.bf16.mxu0 0
    %992 = vmatpush1.bf16.msra.mxu0 0
    %993 = vmatprep.mubr.bf16.mxu0 0
    %994 = vmatmul.mubr.bf16.gmra.mrb[0].mxu0 %v816
    %v995 = vpop.f32.mrb[0].mxu0
    %v996 = vadd.f32 %v821, %v995
    %v997 = vpop.f32.mrb[0].mxu0
    %v998 = vadd.f32 %v825, %v997
    %v999 = vpop.f32.mrb[0].mxu0
    %v1000 = vpop.f32.mrb[0].mxu0
    %1001 = vdwg.mxu0
    %1002 = vmatprep.subr.bf16.mxu0 0
    %1003 = vmatpush1.bf16.msra.mxu0 %v915
    %1004 = vmatprep.subr.bf16.mxu0 0
    %1005 = vmatpush1.bf16.msra.mxu0 %v918
    %1006 = vmatprep.subr.bf16.mxu0 0
    %1007 = vmatpush1.bf16.msra.mxu0 %v921
    %1008 = vmatprep.subr.bf16.mxu0 0
    %1009 = vmatpush1.bf16.msra.mxu0 %v924
    %1010 = vmatprep.subr.bf16.mxu0 0
    %1011 = vmatpush1.bf16.msra.mxu0 %v927
    %1012 = vmatprep.subr.bf16.mxu0 0
    %1013 = vmatpush1.bf16.msra.mxu0 %v930
    %1014 = vmatprep.subr.bf16.mxu0 0
    %1015 = vmatpush1.bf16.msra.mxu0 %v933
    %1016 = vmatprep.subr.bf16.mxu0 0
    %1017 = vmatpush1.bf16.msra.mxu0 %v936
    %1018 = vmatprep.subr.bf16.mxu0 0
    %1019 = vmatpush1.bf16.msra.mxu0 0
    %1020 = vmatprep.subr.bf16.mxu0 0
    %1021 = vmatpush1.bf16.msra.mxu0 0
    %1022 = vmatprep.subr.bf16.mxu0 0
    %1023 = vmatpush1.bf16.msra.mxu0 0
    %1024 = vmatprep.subr.bf16.mxu0 0
    %1025 = vmatpush1.bf16.msra.mxu0 0
    %1026 = vmatprep.subr.bf16.mxu0 0
    %1027 = vmatpush1.bf16.msra.mxu0 0
    %1028 = vmatprep.subr.bf16.mxu0 0
    %1029 = vmatpush1.bf16.msra.mxu0 0
    %1030 = vmatprep.subr.bf16.mxu0 0
    %1031 = vmatpush1.bf16.msra.mxu0 0
    %1032 = vmatprep.subr.bf16.mxu0 0
    %1033 = vmatpush1.bf16.msra.mxu0 0
    %1034 = vmatprep.mubr.bf16.mxu0 0
    %1035 = vmatmul.mubr.bf16.gmra.mrb[0].mxu0 %v816
    %v1036 = vpop.f32.mrb[0].mxu0
    %v1037 = vadd.f32 %v829, %v1036
    %v1038 = vpop.f32.mrb[0].mxu0
    %v1039 = vpop.f32.mrb[0].mxu0
    %v1040 = vpop.f32.mrb[0].mxu0
    %1041 = vdwg.mxu0
    %v1042 = vpack.c.bf16 %v815, %v815
    %v1044 = vlaneseq
    %v1045 = vshrl.u32 %v1044, 7
    %v1046 = vsub.s32 0, %v1045
    %v1047 = vrot.slane %v813, %v1046
    %v1048 = vlaneseq
    %v1049 = vshrl.u32 %v1048, 7
    %v1050 = vsub.s32 1, %v1049
    %v1051 = vrot.slane %v813, %v1050
    %v1052 = vlaneseq
    %v1053 = vshrl.u32 %v1052, 7
    %v1054 = vsub.s32 2, %v1053
    %v1055 = vrot.slane %v813, %v1054
    %v1091 = vunpack.c.l.b16 %v780
    %v1092 = vunpack.c.h.b16 %v780
    %v1093 = vunpack.c.l.b16 %v781
    %v1094 = vunpack.c.l.b16 %v782
    %v1095 = vunpack.c.h.b16 %v782
    %v1096 = vunpack.c.l.b16 %v783
    %v1097 = vunpack.c.l.b16 %v784
    %v1098 = vunpack.c.h.b16 %v784
    %v1099 = vunpack.c.l.b16 %v785
    %v1100 = vunpack.c.l.b16 %v786
    %v1101 = vunpack.c.h.b16 %v786
    %v1102 = vunpack.c.l.b16 %v787
    %v1103 = vunpack.c.l.b16 %v788
    %v1104 = vunpack.c.h.b16 %v788
    %v1105 = vunpack.c.l.b16 %v789
    %v1106 = vunpack.c.l.b16 %v790
    %v1107 = vunpack.c.h.b16 %v790
    %v1108 = vunpack.c.l.b16 %v791
    %v1109 = vunpack.c.l.b16 %v792
    %v1110 = vunpack.c.h.b16 %v792
    %v1111 = vunpack.c.l.b16 %v793
    %v1112 = vunpack.c.l.b16 %v794
    %v1113 = vunpack.c.h.b16 %v794
    %v1114 = vunpack.c.l.b16 %v795
    %v1115 = vunpack.c.l.b16 %v796
    %v1116 = vunpack.c.h.b16 %v796
    %v1117 = vunpack.c.l.b16 %v797
    %v1118 = vunpack.c.l.b16 %v798
    %v1119 = vunpack.c.h.b16 %v798
    %v1120 = vunpack.c.l.b16 %v799
    %v1121 = vunpack.c.l.b16 %v800
    %v1122 = vunpack.c.h.b16 %v800
    %v1123 = vunpack.c.l.b16 %v801
    %v1124 = vunpack.c.l.b16 %v802
    %v1125 = vunpack.c.h.b16 %v802
    %v1126 = vunpack.c.l.b16 %v803
    %v1127 = vunpack.c.l.b16 %v804
    %v1128 = vunpack.c.h.b16 %v804
    %v1129 = vunpack.c.l.b16 %v805
    %v1130 = vunpack.c.l.b16 %v806
    %v1131 = vunpack.c.h.b16 %v806
    %v1132 = vunpack.c.l.b16 %v807
    %v1133 = vunpack.c.l.b16 %v808
    %v1134 = vunpack.c.h.b16 %v808
    %v1135 = vunpack.c.l.b16 %v809
    %v1136 = vunpack.c.l.b16 %v810
    %v1137 = vunpack.c.h.b16 %v810
    %v1138 = vunpack.c.l.b16 %v811
    %v1139 = vpack.c.b16 %v1094, %v1091
    %v1140 = vpack.c.b16 %v1095, %v1092
    %v1141 = vpack.c.b16 %v1096, %v1093
    %v1142 = vpack.c.b16 %v1100, %v1097
    %v1143 = vpack.c.b16 %v1101, %v1098
    %v1144 = vpack.c.b16 %v1102, %v1099
    %v1145 = vpack.c.b16 %v1106, %v1103
    %v1146 = vpack.c.b16 %v1107, %v1104
    %v1147 = vpack.c.b16 %v1108, %v1105
    %v1148 = vpack.c.b16 %v1112, %v1109
    %v1149 = vpack.c.b16 %v1113, %v1110
    %v1150 = vpack.c.b16 %v1114, %v1111
    %v1151 = vpack.c.b16 %v1118, %v1115
    %v1152 = vpack.c.b16 %v1119, %v1116
    %v1153 = vpack.c.b16 %v1120, %v1117
    %v1154 = vpack.c.b16 %v1124, %v1121
    %v1155 = vpack.c.b16 %v1125, %v1122
    %v1156 = vpack.c.b16 %v1126, %v1123
    %v1157 = vpack.c.b16 %v1130, %v1127
    %v1158 = vpack.c.b16 %v1131, %v1128
    %v1159 = vpack.c.b16 %v1132, %v1129
    %v1160 = vpack.c.b16 %v1136, %v1133
    %v1161 = vpack.c.b16 %v1137, %v1134
    %v1162 = vpack.c.b16 %v1138, %v1135
    %1187 = vmatprep.subr.bf16.mxu0 %v1140
    %1188 = vmatpush1.bf16.msra.mxu0 %v1139
    %1189 = vmatprep.subr.bf16.mxu0 %v1143
    %1190 = vmatpush1.bf16.msra.mxu0 %v1142
    %1191 = vmatprep.subr.bf16.mxu0 %v1146
    %1192 = vmatpush1.bf16.msra.mxu0 %v1145
    %1193 = vmatprep.subr.bf16.mxu0 %v1149
    %1194 = vmatpush1.bf16.msra.mxu0 %v1148
    %1195 = vmatprep.subr.bf16.mxu0 %v1152
    %1196 = vmatpush1.bf16.msra.mxu0 %v1151
    %1197 = vmatprep.subr.bf16.mxu0 %v1155
    %1198 = vmatpush1.bf16.msra.mxu0 %v1154
    %1199 = vmatprep.subr.bf16.mxu0 %v1158
    %1200 = vmatpush1.bf16.msra.mxu0 %v1157
    %1201 = vmatprep.subr.bf16.mxu0 %v1161
    %1202 = vmatpush1.bf16.msra.mxu0 %v1160
    %1203 = vmatprep.subr.bf16.mxu0 0
    %1204 = vmatpush1.bf16.msra.mxu0 0
    %1205 = vmatprep.subr.bf16.mxu0 0
    %1206 = vmatpush1.bf16.msra.mxu0 0
    %1207 = vmatprep.subr.bf16.mxu0 0
    %1208 = vmatpush1.bf16.msra.mxu0 0
    %1209 = vmatprep.subr.bf16.mxu0 0
    %1210 = vmatpush1.bf16.msra.mxu0 0
    %1211 = vmatprep.subr.bf16.mxu0 0
    %1212 = vmatpush1.bf16.msra.mxu0 0
    %1213 = vmatprep.subr.bf16.mxu0 0
    %1214 = vmatpush1.bf16.msra.mxu0 0
    %1215 = vmatprep.subr.bf16.mxu0 0
    %1216 = vmatpush1.bf16.msra.mxu0 0
    %1217 = vmatprep.subr.bf16.mxu0 0
    %1218 = vmatpush1.bf16.msra.mxu0 0
    %1219 = vmatprep.mubr.bf16.mxu0 0
    %1220 = vmatmul.mubr.bf16.gmra.mrb[0].mxu0 %v1042
    %v1221 = vpop.f32.mrb[0].mxu0
    %v1222 = vadd.f32 %v1047, %v1221
    %v1223 = vpop.f32.mrb[0].mxu0
    %v1224 = vadd.f32 %v1051, %v1223
    %v1225 = vpop.f32.mrb[0].mxu0
    %v1226 = vpop.f32.mrb[0].mxu0
    %1227 = vdwg.mxu0
    %1228 = vmatprep.subr.bf16.mxu0 0
    %1229 = vmatpush1.bf16.msra.mxu0 %v1141
    %1230 = vmatprep.subr.bf16.mxu0 0
    %1231 = vmatpush1.bf16.msra.mxu0 %v1144
    %1232 = vmatprep.subr.bf16.mxu0 0
    %1233 = vmatpush1.bf16.msra.mxu0 %v1147
    %1234 = vmatprep.subr.bf16.mxu0 0
    %1235 = vmatpush1.bf16.msra.mxu0 %v1150
    %1236 = vmatprep.subr.bf16.mxu0 0
    %1237 = vmatpush1.bf16.msra.mxu0 %v1153
    %1238 = vmatprep.subr.bf16.mxu0 0
    %1239 = vmatpush1.bf16.msra.mxu0 %v1156
    %1240 = vmatprep.subr.bf16.mxu0 0
    %1241 = vmatpush1.bf16.msra.mxu0 %v1159
    %1242 = vmatprep.subr.bf16.mxu0 0
    %1243 = vmatpush1.bf16.msra.mxu0 %v1162
    %1244 = vmatprep.subr.bf16.mxu0 0
    %1245 = vmatpush1.bf16.msra.mxu0 0
    %1246 = vmatprep.subr.bf16.mxu0 0
    %1247 = vmatpush1.bf16.msra.mxu0 0
    %1248 = vmatprep.subr.bf16.mxu0 0
    %1249 = vmatpush1.bf16.msra.mxu0 0
    %1250 = vmatprep.subr.bf16.mxu0 0
    %1251 = vmatpush1.bf16.msra.mxu0 0
    %1252 = vmatprep.subr.bf16.mxu0 0
    %1253 = vmatpush1.bf16.msra.mxu0 0
    %1254 = vmatprep.subr.bf16.mxu0 0
    %1255 = vmatpush1.bf16.msra.mxu0 0
    %1256 = vmatprep.subr.bf16.mxu0 0
    %1257 = vmatpush1.bf16.msra.mxu0 0
    %1258 = vmatprep.subr.bf16.mxu0 0
    %1259 = vmatpush1.bf16.msra.mxu0 0
    %1260 = vmatprep.mubr.bf16.mxu0 0
    %1261 = vmatmul.mubr.bf16.gmra.mrb[0].mxu0 %v1042
    %v1262 = vpop.f32.mrb[0].mxu0
    %v1263 = vadd.f32 %v1055, %v1262
    %v1264 = vpop.f32.mrb[0].mxu0
    %v1265 = vpop.f32.mrb[0].mxu0
    %v1266 = vpop.f32.mrb[0].mxu0
    %1267 = vdwg.mxu0
    %v1268 = vadd.f32 %v996, %v1222
    %v1269 = vxor.u32 %v1268, 2147483648
    %v1270 = vmul.f32 %v1269, 1.442695
    %v1271 = vpow.pop %v1270
    %v1272 = vadd.f32 %v1271, 1.0
    %v1273 = vrcp.pop %v1272
    %v1274 = vmul.f32 1.0, %v1273
    %v1275 = vadd.f32 %v998, %v1224
    %v1276 = vxor.u32 %v1275, 2147483648
    %v1277 = vmul.f32 %v1276, 1.442695
    %v1278 = vpow.pop %v1277
    %v1279 = vadd.f32 %v1278, 1.0
    %v1280 = vrcp.pop %v1279
    %v1281 = vmul.f32 1.0, %v1280
    %v1282 = vmul.f32 %v1274, %v1263
    %v1283 = vadd.f32 %v1037, %v1282
    %v1284 = vtanh.pop %v1283
    %v1285 = vsub.f32 1.0, %v1281
    %v1286 = vmul.f32 %v1285, %v1284
    %v1287 = vmul.f32 %v1281, %v815
    %v1288 = vadd.f32 %v1286, %v1287
    %s1289 = scalar_lea.vmem %s14, 8
    %1290 = vst [vmem:[%s1289] sm:$0xff] %v1288
    %v1291 = vpack.c.bf16 %v1288, %v1288
    %v1292 = vld [vmem:[%s11] sm:$0xf]
    %v1293 = vld [vmem:[%s11 + $0x4] sm:$0xf]
    %v1294 = vld [vmem:[%s11 + $0x8] sm:$0xf]
    %v1295 = vld [vmem:[%s11 + $0xc] sm:$0xf]
    %v1296 = vld [vmem:[%s11 + $0x10] sm:$0xf]
    %v1297 = vld [vmem:[%s11 + $0x14] sm:$0xf]
    %v1298 = vld [vmem:[%s11 + $0x18] sm:$0xf]
    %v1299 = vld [vmem:[%s11 + $0x1c] sm:$0xf]
    %v1300 = vld [vmem:[%s11 + $0x20] sm:$0xf]
    %v1301 = vld [vmem:[%s11 + $0x24] sm:$0xf]
    %v1302 = vld [vmem:[%s11 + $0x28] sm:$0xf]
    %v1303 = vld [vmem:[%s11 + $0x2c] sm:$0xf]
    %v1304 = vld [vmem:[%s11 + $0x30] sm:$0xf]
    %v1305 = vld [vmem:[%s11 + $0x34] sm:$0xf]
    %v1306 = vld [vmem:[%s11 + $0x38] sm:$0xf]
    %v1307 = vld [vmem:[%s11 + $0x3c] sm:$0xf]
    %v1308 = vld [vmem:[%s12] sm:$0x1]
    %v1310 = vlaneseq
    %v1311 = vshrl.u32 %v1310, 7
    %v1312 = vsub.s32 0, %v1311
    %v1313 = vrot.slane %v1308, %v1312
    %v1331 = vunpack.c.l.b16 %v1292
    %v1332 = vunpack.c.l.b16 %v1293
    %v1333 = vunpack.c.l.b16 %v1294
    %v1334 = vunpack.c.l.b16 %v1295
    %v1335 = vunpack.c.l.b16 %v1296
    %v1336 = vunpack.c.l.b16 %v1297
    %v1337 = vunpack.c.l.b16 %v1298
    %v1338 = vunpack.c.l.b16 %v1299
    %v1339 = vunpack.c.l.b16 %v1300
    %v1340 = vunpack.c.l.b16 %v1301
    %v1341 = vunpack.c.l.b16 %v1302
    %v1342 = vunpack.c.l.b16 %v1303
    %v1343 = vunpack.c.l.b16 %v1304
    %v1344 = vunpack.c.l.b16 %v1305
    %v1345 = vunpack.c.l.b16 %v1306
    %v1346 = vunpack.c.l.b16 %v1307
    %v1347 = vpack.c.b16 %v1332, %v1331
    %v1348 = vpack.c.b16 %v1334, %v1333
    %v1349 = vpack.c.b16 %v1336, %v1335
    %v1350 = vpack.c.b16 %v1338, %v1337
    %v1351 = vpack.c.b16 %v1340, %v1339
    %v1352 = vpack.c.b16 %v1342, %v1341
    %v1353 = vpack.c.b16 %v1344, %v1343
    %v1354 = vpack.c.b16 %v1346, %v1345
    %1363 = vmatprep.subr.bf16.mxu0 0
    %1364 = vmatpush1.bf16.msra.mxu0 %v1347
    %1365 = vmatprep.subr.bf16.mxu0 0
    %1366 = vmatpush1.bf16.msra.mxu0 %v1348
    %1367 = vmatprep.subr.bf16.mxu0 0
    %1368 = vmatpush1.bf16.msra.mxu0 %v1349
    %1369 = vmatprep.subr.bf16.mxu0 0
    %1370 = vmatpush1.bf16.msra.mxu0 %v1350
    %1371 = vmatprep.subr.bf16.mxu0 0
    %1372 = vmatpush1.bf16.msra.mxu0 %v1351
    %1373 = vmatprep.subr.bf16.mxu0 0
    %1374 = vmatpush1.bf16.msra.mxu0 %v1352
    %1375 = vmatprep.subr.bf16.mxu0 0
    %1376 = vmatpush1.bf16.msra.mxu0 %v1353
    %1377 = vmatprep.subr.bf16.mxu0 0
    %1378 = vmatpush1.bf16.msra.mxu0 %v1354
    %1379 = vmatprep.subr.bf16.mxu0 0
    %1380 = vmatpush1.bf16.msra.mxu0 0
    %1381 = vmatprep.subr.bf16.mxu0 0
    %1382 = vmatpush1.bf16.msra.mxu0 0
    %1383 = vmatprep.subr.bf16.mxu0 0
    %1384 = vmatpush1.bf16.msra.mxu0 0
    %1385 = vmatprep.subr.bf16.mxu0 0
    %1386 = vmatpush1.bf16.msra.mxu0 0
    %1387 = vmatprep.subr.bf16.mxu0 0
    %1388 = vmatpush1.bf16.msra.mxu0 0
    %1389 = vmatprep.subr.bf16.mxu0 0
    %1390 = vmatpush1.bf16.msra.mxu0 0
    %1391 = vmatprep.subr.bf16.mxu0 0
    %1392 = vmatpush1.bf16.msra.mxu0 0
    %1393 = vmatprep.subr.bf16.mxu0 0
    %1394 = vmatpush1.bf16.msra.mxu0 0
    %1395 = vmatprep.mubr.bf16.mxu0 0
    %1396 = vmatmul.mubr.bf16.gmra.mrb[0].mxu0 %v1291
    %v1397 = vpop.f32.mrb[0].mxu0
    %v1398 = vadd.f32 %v1313, %v1397
    %v1399 = vpop.f32.mrb[0].mxu0
    %v1400 = vpop.f32.mrb[0].mxu0
    %v1401 = vpop.f32.mrb[0].mxu0
    %1402 = vdwg.mxu0
    %1403 = vst [vmem:[%s13] sm:$0xff] %v1398
    // Predicated region
    $region94: #{decoder_gru_forward.1} parent=1 // pred_check
      _
    $region95: #{decoder_gru_forward.1} parent=1 // pred_check_branch
      %1405 = sbr.rel (0) target = $region97
    $region96: #{decoder_gru_forward.1} parent=1 // pred_region
      _
    $region97: #{decoder_gru_forward.1} parent=1 // pred_fallthru
      _
    // Predicated region
    $region98: #{decoder_gru_forward.1} parent=1 // pred_check
      _
    $region99: #{decoder_gru_forward.1} parent=1 // pred_check_branch
      %1407 = sbr.rel (0) target = $region101
    $region100: #{decoder_gru_forward.1} parent=1 // pred_region
      _
    $region101: #{decoder_gru_forward.1} parent=1 // pred_fallthru
      _
    // Predicated region
    $region102: #{decoder_gru_forward.1} parent=1 // pred_check
      _
    $region103: #{decoder_gru_forward.1} parent=1 // pred_check_branch
      %1409 = sbr.rel (0) target = $region105
    $region104: #{decoder_gru_forward.1} parent=1 // pred_region
      _
    $region105: #{decoder_gru_forward.1} parent=1 // pred_fallthru
      _
    // Predicated region
    $region106: #{decoder_gru_forward.1} parent=1 // pred_check
      _
    $region107: #{decoder_gru_forward.1} parent=1 // pred_check_branch
      %1411 = sbr.rel (0) target = $region109
    $region108: #{decoder_gru_forward.1} parent=1 // pred_region
      _
    $region109: #{decoder_gru_forward.1} parent=1 // pred_fallthru
      _
    %1412 = vsyncpa [#allocation4], 1
    %1413 = vsyncpa [#allocation8], 1
    %1414 = vsyncpa [#allocation11], 1
    %1415 = vsyncpa [#allocation14], 1
    %1416 = vsyncpa [#allocation17], 1
    %1417 = vsyncpa [#allocation5], 1

</llo_original>
